<compile_context>
chip_gen: v7x
topology: tpu7x:2x2x1
jax: 0.10.0
libtpu: 0.0.40
codegen_flags: <defaults>
</compile_context>

<pallas_src>
import functools

import jax
import jax.numpy as jnp
from jax.experimental import pallas as pl
from jax.experimental.pallas import tpu as pltpu


def _cmm(ar, ai, br, bi):
    """Karatsuba complex matmul: 3 real MXU matmuls instead of 4 (f32 acc)."""
    f32 = jnp.float32
    t1 = jnp.dot(ar, br, preferred_element_type=f32)
    t2 = jnp.dot(ai, bi, preferred_element_type=f32)
    t3 = jnp.dot(ar + ai, br + bi, preferred_element_type=f32)
    return t1 - t2, t3 - t1 - t2


def _mish(x):
    # mish(x) = x * tanh(softplus(x)) = x * (t^2 + 2t) / (t^2 + 2t + 2), t=e^x
    # (1 exp + 1 divide instead of exp + log1p + tanh; clamp keeps t^2 finite,
    #  ratio is already 1.0 to f32 precision at x >= 20).
    t = jnp.exp(jnp.minimum(x, 20.0))
    n = t * (t + 2.0)
    return x * (n / (n + 2.0))


def fused_kernel(xr_ref, xi_ref, ur_ref, ui_ref, oR_ref, oI_ref,
                 mr_ref, mi_ref, wo_ref, bo_ref,
                 w1_ref, b1_ref, w2_ref, b2_ref, w3_ref, b3_ref,
                 y_ref, *, num_layers, batch, pdim):
    L, B, P = num_layers, batch, pdim
    f32 = jnp.float32

    # ---- chain: out_b = M[L-1] @ x_b[L-1] @ ... @ M[0] @ x_b[0]; out = u - out
    # Batch stacked along lanes: state is (P, B*P), so the shared-M stages are
    # a single (P,P)@(P,B*P) matmul for all batch elements.
    outR = jnp.concatenate([xr_ref[b, 0] for b in range(B)], axis=-1)
    outI = jnp.concatenate([xi_ref[b, 0] for b in range(B)], axis=-1)
    for i in range(L - 1):
        tR, tI = _cmm(mr_ref[i], mi_ref[i], outR, outI)          # M[i] @ out (batched)
        colsR, colsI = [], []
        for b in range(B):                                       # x_b[i+1] @ temp_b
            rb, ib = _cmm(xr_ref[b, i + 1], xi_ref[b, i + 1],
                          tR[:, b * P:(b + 1) * P], tI[:, b * P:(b + 1) * P])
            colsR.append(rb)
            colsI.append(ib)
        outR = jnp.concatenate(colsR, axis=-1)
        outI = jnp.concatenate(colsI, axis=-1)
    outR, outI = _cmm(mr_ref[L - 1], mi_ref[L - 1], outR, outI)  # final shared M

    # ---- residual + torch cat((real, imag), -1).flatten(1) layout, built
    # lane-dense in registers: per row r -> [real_row_r | imag_row_r].
    flat_rows = []
    for b in range(B):
        resR = ur_ref[b] - outR[:, b * P:(b + 1) * P]
        resI = ui_ref[b] - outI[:, b * P:(b + 1) * P]
        res = jnp.concatenate([resR, resI], axis=-1)             # (P, 2P)
        flat_rows.append(
            jnp.concatenate([res[r:r + 1, :] for r in range(P)], axis=-1))  # (1, 2*P*P)
    slab = jnp.concatenate(flat_rows, axis=0)                    # (B, 2*P*P)

    # ---- o embedding, concat, 3-layer Mish head (all fused; only (B,1) hits HBM)
    o_flat = jnp.concatenate([oR_ref[...], oI_ref[...]], axis=-1)        # (B, 2*OD)
    o_emb = jnp.dot(o_flat, wo_ref[...], preferred_element_type=f32) + bo_ref[...]
    h = jnp.concatenate([slab, o_emb], axis=-1)                  # (B, 3*P*P)
    h = _mish(jnp.dot(h, w1_ref[...], preferred_element_type=f32) + b1_ref[...])
    h = _mish(jnp.dot(h, w2_ref[...], preferred_element_type=f32) + b2_ref[...])
    y_ref[...] = jnp.dot(h, w3_ref[...], preferred_element_type=f32) + b3_ref[...]


def _full_spec(shape):
    zero = (0,) * len(shape)
    return pl.BlockSpec(shape, lambda i, _z=zero: _z)


def quantum_model_v3_forward(xr, xi, ur, ui, o_r, o_i, mr, mi,
                             wo, bo, w1, b1, w2, b2, w3, b3):
    B, L, P, _ = xr.shape
    kernel = functools.partial(fused_kernel, num_layers=L, batch=B, pdim=P)
    args = (xr, xi, ur, ui, o_r, o_i, mr, mi, wo, bo, w1, b1, w2, b2, w3, b3)
    return pl.pallas_call(
        kernel,
        out_shape=jax.ShapeDtypeStruct((B, 1), jnp.float32),
        grid=(1,),                              # whole batch in one grid step
        in_specs=[_full_spec(a.shape) for a in args],
        out_specs=pl.BlockSpec((B, 1), lambda i: (0, 0)),
        compiler_params=pltpu.CompilerParams(dimension_semantics=("arbitrary",)),
    )(*args)


if __name__ == "__main__":
    # Small config: num_qubits=3 -> P=8, num_layers=3, batch=2.
    num_qubits = 3
    num_layers = 3
    B = 2
    P = 2 ** num_qubits          # 8
    head_in = 2 * P * P          # 128
    H = head_in // 2             # 64
    O_DIM = 4                    # complex observables per sample -> 2*O_DIM = 8
    concat_dim = head_in + H     # 192 (actual width of head input, see TODO above)

    key = jax.random.PRNGKey(0)
    ks = jax.random.split(key, 16)

    s = 0.25                     # keep chain magnitudes ~O(1)
    xr = s * jax.random.normal(ks[0], (B, num_layers, P, P), jnp.float32)
    xi = s * jax.random.normal(ks[1], (B, num_layers, P, P), jnp.float32)
    ur = jax.random.normal(ks[2], (B, P, P), jnp.float32)
    ui = jax.random.normal(ks[3], (B, P, P), jnp.float32)
    o_r = jax.random.normal(ks[4], (B, O_DIM), jnp.float32)
    o_i = jax.random.normal(ks[5], (B, O_DIM), jnp.float32)
    # random complex M (exercises the real/imag cross terms, unlike identity init)
    mr = s * jax.random.normal(ks[6], (num_layers, P, P), jnp.float32)
    mi = s * jax.random.normal(ks[7], (num_layers, P, P), jnp.float32)

    def linear_init(kw, kb, fan_in, fan_out):
        bound = 1.0 / float(fan_in) ** 0.5
        w = jax.random.uniform(kw, (fan_in, fan_out), jnp.float32, -bound, bound)
        b = jax.random.uniform(kb, (1, fan_out), jnp.float32, -bound, bound)
        return w, b

    wo, bo = linear_init(ks[8], ks[9], 2 * O_DIM, H)
    w1, b1 = linear_init(ks[10], ks[11], concat_dim, H)
    w2, b2 = linear_init(ks[12], ks[13], H, H)
    w3, b3 = linear_init(ks[14], ks[15], H, 1)

    y = quantum_model_v3_forward(xr, xi, ur, ui, o_r, o_i, mr, mi,
                                 wo, bo, w1, b1, w2, b2, w3, b3)
    y = jax.block_until_ready(y)

    # ---- pure-JAX reference (complex64) ----
    xc = (xr + 1j * xi).astype(jnp.complex64)
    uc = (ur + 1j * ui).astype(jnp.complex64)
    mc = (mr + 1j * mi).astype(jnp.complex64)
    out = xc[:, 0]
    for i in range(num_layers - 1):
        out = jnp.matmul(mc[i], out)
        out = jnp.matmul(xc[:, i + 1], out)
    out = jnp.matmul(mc[-1], out)
    out = uc - out
    flat_ref = jnp.concatenate([out.real, out.imag], axis=-1).reshape(B, -1)
    o_emb_ref = jnp.concatenate([o_r, o_i], axis=-1) @ wo + bo
    cat_ref = jnp.concatenate([flat_ref, o_emb_ref], axis=-1)

    def mish(v):
        return v * jnp.tanh(jax.nn.softplus(v))

    h = mish(cat_ref @ w1 + b1)
    h = mish(h @ w2 + b2)
    y_ref = h @ w3 + b3

    assert y.shape == (B, 1)
    assert jnp.allclose(y, y_ref, atol=1e-4, rtol=1e-4), (y, y_ref)
    print("KERNEL_OK")
</pallas_src>

<mosaic_0001>
module attributes {stable_mosaic.version = 11 : i64} {
  func.func @fused_kernel(%arg0: i32, %arg1: memref<2x3x8x8xf32, #tpu.memory_space<vmem>>, %arg2: memref<2x3x8x8xf32, #tpu.memory_space<vmem>>, %arg3: memref<2x8x8xf32, #tpu.memory_space<vmem>>, %arg4: memref<2x8x8xf32, #tpu.memory_space<vmem>>, %arg5: memref<2x4xf32, #tpu.memory_space<vmem>>, %arg6: memref<2x4xf32, #tpu.memory_space<vmem>>, %arg7: memref<3x8x8xf32, #tpu.memory_space<vmem>>, %arg8: memref<3x8x8xf32, #tpu.memory_space<vmem>>, %arg9: memref<8x64xf32, #tpu.memory_space<vmem>>, %arg10: memref<1x64xf32, #tpu.memory_space<vmem>>, %arg11: memref<192x64xf32, #tpu.memory_space<vmem>>, %arg12: memref<1x64xf32, #tpu.memory_space<vmem>>, %arg13: memref<64x64xf32, #tpu.memory_space<vmem>>, %arg14: memref<1x64xf32, #tpu.memory_space<vmem>>, %arg15: memref<64x1xf32, #tpu.memory_space<vmem>>, %arg16: memref<1x1xf32, #tpu.memory_space<vmem>>, %arg17: memref<2x1xf32, #tpu.memory_space<vmem>>) attributes {dimension_semantics = [#tpu.dimension_semantics<arbitrary>], iteration_bounds = array<i64: 1>, scalar_prefetch = 0 : i64, scratch_operands = 0 : i64, tpu.core_type = #tpu.core_type<tc>, window_params = [{pipeline_mode = #tpu.pipeline_mode<synchronous>, transform_indices = @transform_0, window_bounds = array<i64: 2, 3, 8, 8>}, {pipeline_mode = #tpu.pipeline_mode<synchronous>, transform_indices = @transform_1, window_bounds = array<i64: 2, 3, 8, 8>}, {pipeline_mode = #tpu.pipeline_mode<synchronous>, transform_indices = @transform_2, window_bounds = array<i64: 2, 8, 8>}, {pipeline_mode = #tpu.pipeline_mode<synchronous>, transform_indices = @transform_3, window_bounds = array<i64: 2, 8, 8>}, {pipeline_mode = #tpu.pipeline_mode<synchronous>, transform_indices = @transform_4, window_bounds = array<i64: 2, 4>}, {pipeline_mode = #tpu.pipeline_mode<synchronous>, transform_indices = @transform_5, window_bounds = array<i64: 2, 4>}, {pipeline_mode = #tpu.pipeline_mode<synchronous>, transform_indices = @transform_6, window_bounds = array<i64: 3, 8, 8>}, {pipeline_mode = #tpu.pipeline_mode<synchronous>, transform_indices = @transform_7, window_bounds = array<i64: 3, 8, 8>}, {pipeline_mode = #tpu.pipeline_mode<synchronous>, transform_indices = @transform_8, window_bounds = array<i64: 8, 64>}, {pipeline_mode = #tpu.pipeline_mode<synchronous>, transform_indices = @transform_9, window_bounds = array<i64: 1, 64>}, {pipeline_mode = #tpu.pipeline_mode<synchronous>, transform_indices = @transform_10, window_bounds = array<i64: 192, 64>}, {pipeline_mode = #tpu.pipeline_mode<synchronous>, transform_indices = @transform_11, window_bounds = array<i64: 1, 64>}, {pipeline_mode = #tpu.pipeline_mode<synchronous>, transform_indices = @transform_12, window_bounds = array<i64: 64, 64>}, {pipeline_mode = #tpu.pipeline_mode<synchronous>, transform_indices = @transform_13, window_bounds = array<i64: 1, 64>}, {pipeline_mode = #tpu.pipeline_mode<synchronous>, transform_indices = @transform_14, window_bounds = array<i64: 64, 1>}, {pipeline_mode = #tpu.pipeline_mode<synchronous>, transform_indices = @transform_15, window_bounds = array<i64: 1, 1>}, {pipeline_mode = #tpu.pipeline_mode<synchronous>, transform_indices = @transform_16, window_bounds = array<i64: 2, 1>}]} {
    %c0 = arith.constant 0 : index
    %c0_0 = arith.constant 0 : index
    %c0_1 = arith.constant 0 : index
    %c0_2 = arith.constant 0 : index
    %0 = vector.load %arg1[%c0, %c0_0, %c0_1, %c0_2] : memref<2x3x8x8xf32, #tpu.memory_space<vmem>>, vector<1x1x8x8xf32>
    %1 = vector.shape_cast %0 : vector<1x1x8x8xf32> to vector<8x8xf32>
    %c1 = arith.constant 1 : index
    %c0_3 = arith.constant 0 : index
    %c0_4 = arith.constant 0 : index
    %c0_5 = arith.constant 0 : index
    %2 = vector.load %arg1[%c1, %c0_3, %c0_4, %c0_5] : memref<2x3x8x8xf32, #tpu.memory_space<vmem>>, vector<1x1x8x8xf32>
    %3 = vector.shape_cast %2 : vector<1x1x8x8xf32> to vector<8x8xf32>
    %4 = tpu.concatenate %1, %3 in 1 : vector<8x8xf32>, vector<8x8xf32> -> vector<8x16xf32>
    %c0_6 = arith.constant 0 : index
    %c0_7 = arith.constant 0 : index
    %c0_8 = arith.constant 0 : index
    %c0_9 = arith.constant 0 : index
    %5 = vector.load %arg2[%c0_6, %c0_7, %c0_8, %c0_9] : memref<2x3x8x8xf32, #tpu.memory_space<vmem>>, vector<1x1x8x8xf32>
    %6 = vector.shape_cast %5 : vector<1x1x8x8xf32> to vector<8x8xf32>
    %c1_10 = arith.constant 1 : index
    %c0_11 = arith.constant 0 : index
    %c0_12 = arith.constant 0 : index
    %c0_13 = arith.constant 0 : index
    %7 = vector.load %arg2[%c1_10, %c0_11, %c0_12, %c0_13] : memref<2x3x8x8xf32, #tpu.memory_space<vmem>>, vector<1x1x8x8xf32>
    %8 = vector.shape_cast %7 : vector<1x1x8x8xf32> to vector<8x8xf32>
    %9 = tpu.concatenate %6, %8 in 1 : vector<8x8xf32>, vector<8x8xf32> -> vector<8x16xf32>
    %c0_14 = arith.constant 0 : index
    %c0_15 = arith.constant 0 : index
    %c0_16 = arith.constant 0 : index
    %10 = vector.load %arg7[%c0_14, %c0_15, %c0_16] : memref<3x8x8xf32, #tpu.memory_space<vmem>>, vector<1x8x8xf32>
    %11 = vector.shape_cast %10 : vector<1x8x8xf32> to vector<8x8xf32>
    %c0_17 = arith.constant 0 : index
    %c0_18 = arith.constant 0 : index
    %c0_19 = arith.constant 0 : index
    %12 = vector.load %arg8[%c0_17, %c0_18, %c0_19] : memref<3x8x8xf32, #tpu.memory_space<vmem>>, vector<1x8x8xf32>
    %13 = vector.shape_cast %12 : vector<1x8x8xf32> to vector<8x8xf32>
    %cst = arith.constant dense<0.000000e+00> : vector<8x16xf32>
    %14 = tpu.matmul %11, %4, %cst {dimension_numbers = #tpu.dot_dimension_numbers<[1], [0], [0], [1], [0, 0, 1, 1], [], []>} : vector<8x8xf32>, vector<8x16xf32>, vector<8x16xf32> -> vector<8x16xf32>
    %cst_20 = arith.constant dense<0.000000e+00> : vector<8x16xf32>
    %15 = tpu.matmul %13, %9, %cst_20 {dimension_numbers = #tpu.dot_dimension_numbers<[1], [0], [0], [1], [0, 0, 1, 1], [], []>} : vector<8x8xf32>, vector<8x16xf32>, vector<8x16xf32> -> vector<8x16xf32>
    %16 = arith.addf %11, %13 : vector<8x8xf32>
    %17 = arith.addf %4, %9 : vector<8x16xf32>
    %cst_21 = arith.constant dense<0.000000e+00> : vector<8x16xf32>
    %18 = tpu.matmul %16, %17, %cst_21 {dimension_numbers = #tpu.dot_dimension_numbers<[1], [0], [0], [1], [0, 0, 1, 1], [], []>} : vector<8x8xf32>, vector<8x16xf32>, vector<8x16xf32> -> vector<8x16xf32>
    %19 = arith.subf %14, %15 : vector<8x16xf32>
    %20 = arith.subf %18, %14 : vector<8x16xf32>
    %21 = arith.subf %20, %15 : vector<8x16xf32>
    %c0_22 = arith.constant 0 : index
    %c1_23 = arith.constant 1 : index
    %c0_24 = arith.constant 0 : index
    %c0_25 = arith.constant 0 : index
    %22 = vector.load %arg1[%c0_22, %c1_23, %c0_24, %c0_25] : memref<2x3x8x8xf32, #tpu.memory_space<vmem>>, vector<1x1x8x8xf32>
    %23 = vector.shape_cast %22 : vector<1x1x8x8xf32> to vector<8x8xf32>
    %c0_26 = arith.constant 0 : index
    %c1_27 = arith.constant 1 : index
    %c0_28 = arith.constant 0 : index
    %c0_29 = arith.constant 0 : index
    %24 = vector.load %arg2[%c0_26, %c1_27, %c0_28, %c0_29] : memref<2x3x8x8xf32, #tpu.memory_space<vmem>>, vector<1x1x8x8xf32>
    %25 = vector.shape_cast %24 : vector<1x1x8x8xf32> to vector<8x8xf32>
    %26 = vector.extract_strided_slice %19 {offsets = [0, 0], sizes = [8, 8], strides = [1, 1]} : vector<8x16xf32> to vector<8x8xf32>
    %27 = vector.extract_strided_slice %21 {offsets = [0, 0], sizes = [8, 8], strides = [1, 1]} : vector<8x16xf32> to vector<8x8xf32>
    %cst_30 = arith.constant dense<0.000000e+00> : vector<8x8xf32>
    %28 = tpu.matmul %23, %26, %cst_30 {dimension_numbers = #tpu.dot_dimension_numbers<[1], [0], [0], [1], [0, 0, 1, 1], [], []>} : vector<8x8xf32>, vector<8x8xf32>, vector<8x8xf32> -> vector<8x8xf32>
    %cst_31 = arith.constant dense<0.000000e+00> : vector<8x8xf32>
    %29 = tpu.matmul %25, %27, %cst_31 {dimension_numbers = #tpu.dot_dimension_numbers<[1], [0], [0], [1], [0, 0, 1, 1], [], []>} : vector<8x8xf32>, vector<8x8xf32>, vector<8x8xf32> -> vector<8x8xf32>
    %30 = arith.addf %23, %25 : vector<8x8xf32>
    %31 = arith.addf %26, %27 : vector<8x8xf32>
    %cst_32 = arith.constant dense<0.000000e+00> : vector<8x8xf32>
    %32 = tpu.matmul %30, %31, %cst_32 {dimension_numbers = #tpu.dot_dimension_numbers<[1], [0], [0], [1], [0, 0, 1, 1], [], []>} : vector<8x8xf32>, vector<8x8xf32>, vector<8x8xf32> -> vector<8x8xf32>
    %33 = arith.subf %28, %29 : vector<8x8xf32>
    %34 = arith.subf %32, %28 : vector<8x8xf32>
    %35 = arith.subf %34, %29 : vector<8x8xf32>
    %c1_33 = arith.constant 1 : index
    %c1_34 = arith.constant 1 : index
    %c0_35 = arith.constant 0 : index
    %c0_36 = arith.constant 0 : index
    %36 = vector.load %arg1[%c1_33, %c1_34, %c0_35, %c0_36] : memref<2x3x8x8xf32, #tpu.memory_space<vmem>>, vector<1x1x8x8xf32>
    %37 = vector.shape_cast %36 : vector<1x1x8x8xf32> to vector<8x8xf32>
    %c1_37 = arith.constant 1 : index
    %c1_38 = arith.constant 1 : index
    %c0_39 = arith.constant 0 : index
    %c0_40 = arith.constant 0 : index
    %38 = vector.load %arg2[%c1_37, %c1_38, %c0_39, %c0_40] : memref<2x3x8x8xf32, #tpu.memory_space<vmem>>, vector<1x1x8x8xf32>
    %39 = vector.shape_cast %38 : vector<1x1x8x8xf32> to vector<8x8xf32>
    %40 = vector.extract_strided_slice %19 {offsets = [0, 8], sizes = [8, 8], strides = [1, 1]} : vector<8x16xf32> to vector<8x8xf32>
    %41 = vector.extract_strided_slice %21 {offsets = [0, 8], sizes = [8, 8], strides = [1, 1]} : vector<8x16xf32> to vector<8x8xf32>
    %cst_41 = arith.constant dense<0.000000e+00> : vector<8x8xf32>
    %42 = tpu.matmul %37, %40, %cst_41 {dimension_numbers = #tpu.dot_dimension_numbers<[1], [0], [0], [1], [0, 0, 1, 1], [], []>} : vector<8x8xf32>, vector<8x8xf32>, vector<8x8xf32> -> vector<8x8xf32>
    %cst_42 = arith.constant dense<0.000000e+00> : vector<8x8xf32>
    %43 = tpu.matmul %39, %41, %cst_42 {dimension_numbers = #tpu.dot_dimension_numbers<[1], [0], [0], [1], [0, 0, 1, 1], [], []>} : vector<8x8xf32>, vector<8x8xf32>, vector<8x8xf32> -> vector<8x8xf32>
    %44 = arith.addf %37, %39 : vector<8x8xf32>
    %45 = arith.addf %40, %41 : vector<8x8xf32>
    %cst_43 = arith.constant dense<0.000000e+00> : vector<8x8xf32>
    %46 = tpu.matmul %44, %45, %cst_43 {dimension_numbers = #tpu.dot_dimension_numbers<[1], [0], [0], [1], [0, 0, 1, 1], [], []>} : vector<8x8xf32>, vector<8x8xf32>, vector<8x8xf32> -> vector<8x8xf32>
    %47 = arith.subf %42, %43 : vector<8x8xf32>
    %48 = arith.subf %46, %42 : vector<8x8xf32>
    %49 = arith.subf %48, %43 : vector<8x8xf32>
    %50 = tpu.concatenate %33, %47 in 1 : vector<8x8xf32>, vector<8x8xf32> -> vector<8x16xf32>
    %51 = tpu.concatenate %35, %49 in 1 : vector<8x8xf32>, vector<8x8xf32> -> vector<8x16xf32>
    %c1_44 = arith.constant 1 : index
    %c0_45 = arith.constant 0 : index
    %c0_46 = arith.constant 0 : index
    %52 = vector.load %arg7[%c1_44, %c0_45, %c0_46] : memref<3x8x8xf32, #tpu.memory_space<vmem>>, vector<1x8x8xf32>
    %53 = vector.shape_cast %52 : vector<1x8x8xf32> to vector<8x8xf32>
    %c1_47 = arith.constant 1 : index
    %c0_48 = arith.constant 0 : index
    %c0_49 = arith.constant 0 : index
    %54 = vector.load %arg8[%c1_47, %c0_48, %c0_49] : memref<3x8x8xf32, #tpu.memory_space<vmem>>, vector<1x8x8xf32>
    %55 = vector.shape_cast %54 : vector<1x8x8xf32> to vector<8x8xf32>
    %cst_50 = arith.constant dense<0.000000e+00> : vector<8x16xf32>
    %56 = tpu.matmul %53, %50, %cst_50 {dimension_numbers = #tpu.dot_dimension_numbers<[1], [0], [0], [1], [0, 0, 1, 1], [], []>} : vector<8x8xf32>, vector<8x16xf32>, vector<8x16xf32> -> vector<8x16xf32>
    %cst_51 = arith.constant dense<0.000000e+00> : vector<8x16xf32>
    %57 = tpu.matmul %55, %51, %cst_51 {dimension_numbers = #tpu.dot_dimension_numbers<[1], [0], [0], [1], [0, 0, 1, 1], [], []>} : vector<8x8xf32>, vector<8x16xf32>, vector<8x16xf32> -> vector<8x16xf32>
    %58 = arith.addf %53, %55 : vector<8x8xf32>
    %59 = arith.addf %50, %51 : vector<8x16xf32>
    %cst_52 = arith.constant dense<0.000000e+00> : vector<8x16xf32>
    %60 = tpu.matmul %58, %59, %cst_52 {dimension_numbers = #tpu.dot_dimension_numbers<[1], [0], [0], [1], [0, 0, 1, 1], [], []>} : vector<8x8xf32>, vector<8x16xf32>, vector<8x16xf32> -> vector<8x16xf32>
    %61 = arith.subf %56, %57 : vector<8x16xf32>
    %62 = arith.subf %60, %56 : vector<8x16xf32>
    %63 = arith.subf %62, %57 : vector<8x16xf32>
    %c0_53 = arith.constant 0 : index
    %c2 = arith.constant 2 : index
    %c0_54 = arith.constant 0 : index
    %c0_55 = arith.constant 0 : index
    %64 = vector.load %arg1[%c0_53, %c2, %c0_54, %c0_55] : memref<2x3x8x8xf32, #tpu.memory_space<vmem>>, vector<1x1x8x8xf32>
    %65 = vector.shape_cast %64 : vector<1x1x8x8xf32> to vector<8x8xf32>
    %c0_56 = arith.constant 0 : index
    %c2_57 = arith.constant 2 : index
    %c0_58 = arith.constant 0 : index
    %c0_59 = arith.constant 0 : index
    %66 = vector.load %arg2[%c0_56, %c2_57, %c0_58, %c0_59] : memref<2x3x8x8xf32, #tpu.memory_space<vmem>>, vector<1x1x8x8xf32>
    %67 = vector.shape_cast %66 : vector<1x1x8x8xf32> to vector<8x8xf32>
    %68 = vector.extract_strided_slice %61 {offsets = [0, 0], sizes = [8, 8], strides = [1, 1]} : vector<8x16xf32> to vector<8x8xf32>
    %69 = vector.extract_strided_slice %63 {offsets = [0, 0], sizes = [8, 8], strides = [1, 1]} : vector<8x16xf32> to vector<8x8xf32>
    %cst_60 = arith.constant dense<0.000000e+00> : vector<8x8xf32>
    %70 = tpu.matmul %65, %68, %cst_60 {dimension_numbers = #tpu.dot_dimension_numbers<[1], [0], [0], [1], [0, 0, 1, 1], [], []>} : vector<8x8xf32>, vector<8x8xf32>, vector<8x8xf32> -> vector<8x8xf32>
    %cst_61 = arith.constant dense<0.000000e+00> : vector<8x8xf32>
    %71 = tpu.matmul %67, %69, %cst_61 {dimension_numbers = #tpu.dot_dimension_numbers<[1], [0], [0], [1], [0, 0, 1, 1], [], []>} : vector<8x8xf32>, vector<8x8xf32>, vector<8x8xf32> -> vector<8x8xf32>
    %72 = arith.addf %65, %67 : vector<8x8xf32>
    %73 = arith.addf %68, %69 : vector<8x8xf32>
    %cst_62 = arith.constant dense<0.000000e+00> : vector<8x8xf32>
    %74 = tpu.matmul %72, %73, %cst_62 {dimension_numbers = #tpu.dot_dimension_numbers<[1], [0], [0], [1], [0, 0, 1, 1], [], []>} : vector<8x8xf32>, vector<8x8xf32>, vector<8x8xf32> -> vector<8x8xf32>
    %75 = arith.subf %70, %71 : vector<8x8xf32>
    %76 = arith.subf %74, %70 : vector<8x8xf32>
    %77 = arith.subf %76, %71 : vector<8x8xf32>
    %c1_63 = arith.constant 1 : index
    %c2_64 = arith.constant 2 : index
    %c0_65 = arith.constant 0 : index
    %c0_66 = arith.constant 0 : index
    %78 = vector.load %arg1[%c1_63, %c2_64, %c0_65, %c0_66] : memref<2x3x8x8xf32, #tpu.memory_space<vmem>>, vector<1x1x8x8xf32>
    %79 = vector.shape_cast %78 : vector<1x1x8x8xf32> to vector<8x8xf32>
    %c1_67 = arith.constant 1 : index
    %c2_68 = arith.constant 2 : index
    %c0_69 = arith.constant 0 : index
    %c0_70 = arith.constant 0 : index
    %80 = vector.load %arg2[%c1_67, %c2_68, %c0_69, %c0_70] : memref<2x3x8x8xf32, #tpu.memory_space<vmem>>, vector<1x1x8x8xf32>
    %81 = vector.shape_cast %80 : vector<1x1x8x8xf32> to vector<8x8xf32>
    %82 = vector.extract_strided_slice %61 {offsets = [0, 8], sizes = [8, 8], strides = [1, 1]} : vector<8x16xf32> to vector<8x8xf32>
    %83 = vector.extract_strided_slice %63 {offsets = [0, 8], sizes = [8, 8], strides = [1, 1]} : vector<8x16xf32> to vector<8x8xf32>
    %cst_71 = arith.constant dense<0.000000e+00> : vector<8x8xf32>
    %84 = tpu.matmul %79, %82, %cst_71 {dimension_numbers = #tpu.dot_dimension_numbers<[1], [0], [0], [1], [0, 0, 1, 1], [], []>} : vector<8x8xf32>, vector<8x8xf32>, vector<8x8xf32> -> vector<8x8xf32>
    %cst_72 = arith.constant dense<0.000000e+00> : vector<8x8xf32>
    %85 = tpu.matmul %81, %83, %cst_72 {dimension_numbers = #tpu.dot_dimension_numbers<[1], [0], [0], [1], [0, 0, 1, 1], [], []>} : vector<8x8xf32>, vector<8x8xf32>, vector<8x8xf32> -> vector<8x8xf32>
    %86 = arith.addf %79, %81 : vector<8x8xf32>
    %87 = arith.addf %82, %83 : vector<8x8xf32>
    %cst_73 = arith.constant dense<0.000000e+00> : vector<8x8xf32>
    %88 = tpu.matmul %86, %87, %cst_73 {dimension_numbers = #tpu.dot_dimension_numbers<[1], [0], [0], [1], [0, 0, 1, 1], [], []>} : vector<8x8xf32>, vector<8x8xf32>, vector<8x8xf32> -> vector<8x8xf32>
    %89 = arith.subf %84, %85 : vector<8x8xf32>
    %90 = arith.subf %88, %84 : vector<8x8xf32>
    %91 = arith.subf %90, %85 : vector<8x8xf32>
    %92 = tpu.concatenate %75, %89 in 1 : vector<8x8xf32>, vector<8x8xf32> -> vector<8x16xf32>
    %93 = tpu.concatenate %77, %91 in 1 : vector<8x8xf32>, vector<8x8xf32> -> vector<8x16xf32>
    %c2_74 = arith.constant 2 : index
    %c0_75 = arith.constant 0 : index
    %c0_76 = arith.constant 0 : index
    %94 = vector.load %arg7[%c2_74, %c0_75, %c0_76] : memref<3x8x8xf32, #tpu.memory_space<vmem>>, vector<1x8x8xf32>
    %95 = vector.shape_cast %94 : vector<1x8x8xf32> to vector<8x8xf32>
    %c2_77 = arith.constant 2 : index
    %c0_78 = arith.constant 0 : index
    %c0_79 = arith.constant 0 : index
    %96 = vector.load %arg8[%c2_77, %c0_78, %c0_79] : memref<3x8x8xf32, #tpu.memory_space<vmem>>, vector<1x8x8xf32>
    %97 = vector.shape_cast %96 : vector<1x8x8xf32> to vector<8x8xf32>
    %cst_80 = arith.constant dense<0.000000e+00> : vector<8x16xf32>
    %98 = tpu.matmul %95, %92, %cst_80 {dimension_numbers = #tpu.dot_dimension_numbers<[1], [0], [0], [1], [0, 0, 1, 1], [], []>} : vector<8x8xf32>, vector<8x16xf32>, vector<8x16xf32> -> vector<8x16xf32>
    %cst_81 = arith.constant dense<0.000000e+00> : vector<8x16xf32>
    %99 = tpu.matmul %97, %93, %cst_81 {dimension_numbers = #tpu.dot_dimension_numbers<[1], [0], [0], [1], [0, 0, 1, 1], [], []>} : vector<8x8xf32>, vector<8x16xf32>, vector<8x16xf32> -> vector<8x16xf32>
    %100 = arith.addf %95, %97 : vector<8x8xf32>
    %101 = arith.addf %92, %93 : vector<8x16xf32>
    %cst_82 = arith.constant dense<0.000000e+00> : vector<8x16xf32>
    %102 = tpu.matmul %100, %101, %cst_82 {dimension_numbers = #tpu.dot_dimension_numbers<[1], [0], [0], [1], [0, 0, 1, 1], [], []>} : vector<8x8xf32>, vector<8x16xf32>, vector<8x16xf32> -> vector<8x16xf32>
    %103 = arith.subf %98, %99 : vector<8x16xf32>
    %104 = arith.subf %102, %98 : vector<8x16xf32>
    %105 = arith.subf %104, %99 : vector<8x16xf32>
    %c0_83 = arith.constant 0 : index
    %c0_84 = arith.constant 0 : index
    %c0_85 = arith.constant 0 : index
    %106 = vector.load %arg3[%c0_83, %c0_84, %c0_85] : memref<2x8x8xf32, #tpu.memory_space<vmem>>, vector<1x8x8xf32>
    %107 = vector.shape_cast %106 : vector<1x8x8xf32> to vector<8x8xf32>
    %108 = vector.extract_strided_slice %103 {offsets = [0, 0], sizes = [8, 8], strides = [1, 1]} : vector<8x16xf32> to vector<8x8xf32>
    %109 = arith.subf %107, %108 : vector<8x8xf32>
    %c0_86 = arith.constant 0 : index
    %c0_87 = arith.constant 0 : index
    %c0_88 = arith.constant 0 : index
    %110 = vector.load %arg4[%c0_86, %c0_87, %c0_88] : memref<2x8x8xf32, #tpu.memory_space<vmem>>, vector<1x8x8xf32>
    %111 = vector.shape_cast %110 : vector<1x8x8xf32> to vector<8x8xf32>
    %112 = vector.extract_strided_slice %105 {offsets = [0, 0], sizes = [8, 8], strides = [1, 1]} : vector<8x16xf32> to vector<8x8xf32>
    %113 = arith.subf %111, %112 : vector<8x8xf32>
    %114 = tpu.concatenate %109, %113 in 1 : vector<8x8xf32>, vector<8x8xf32> -> vector<8x16xf32>
    %115 = vector.extract_strided_slice %114 {offsets = [0, 0], sizes = [1, 16], strides = [1, 1]} : vector<8x16xf32> to vector<1x16xf32>
    %116 = vector.extract_strided_slice %114 {offsets = [1, 0], sizes = [1, 16], strides = [1, 1]} : vector<8x16xf32> to vector<1x16xf32>
    %117 = vector.extract_strided_slice %114 {offsets = [2, 0], sizes = [1, 16], strides = [1, 1]} : vector<8x16xf32> to vector<1x16xf32>
    %118 = vector.extract_strided_slice %114 {offsets = [3, 0], sizes = [1, 16], strides = [1, 1]} : vector<8x16xf32> to vector<1x16xf32>
    %119 = vector.extract_strided_slice %114 {offsets = [4, 0], sizes = [1, 16], strides = [1, 1]} : vector<8x16xf32> to vector<1x16xf32>
    %120 = vector.extract_strided_slice %114 {offsets = [5, 0], sizes = [1, 16], strides = [1, 1]} : vector<8x16xf32> to vector<1x16xf32>
    %121 = vector.extract_strided_slice %114 {offsets = [6, 0], sizes = [1, 16], strides = [1, 1]} : vector<8x16xf32> to vector<1x16xf32>
    %122 = vector.extract_strided_slice %114 {offsets = [7, 0], sizes = [1, 16], strides = [1, 1]} : vector<8x16xf32> to vector<1x16xf32>
    %123 = tpu.concatenate %115, %116, %117, %118, %119, %120, %121, %122 in 1 : vector<1x16xf32>, vector<1x16xf32>, vector<1x16xf32>, vector<1x16xf32>, vector<1x16xf32>, vector<1x16xf32>, vector<1x16xf32>, vector<1x16xf32> -> vector<1x128xf32>
    %c1_89 = arith.constant 1 : index
    %c0_90 = arith.constant 0 : index
    %c0_91 = arith.constant 0 : index
    %124 = vector.load %arg3[%c1_89, %c0_90, %c0_91] : memref<2x8x8xf32, #tpu.memory_space<vmem>>, vector<1x8x8xf32>
    %125 = vector.shape_cast %124 : vector<1x8x8xf32> to vector<8x8xf32>
    %126 = vector.extract_strided_slice %103 {offsets = [0, 8], sizes = [8, 8], strides = [1, 1]} : vector<8x16xf32> to vector<8x8xf32>
    %127 = arith.subf %125, %126 : vector<8x8xf32>
    %c1_92 = arith.constant 1 : index
    %c0_93 = arith.constant 0 : index
    %c0_94 = arith.constant 0 : index
    %128 = vector.load %arg4[%c1_92, %c0_93, %c0_94] : memref<2x8x8xf32, #tpu.memory_space<vmem>>, vector<1x8x8xf32>
    %129 = vector.shape_cast %128 : vector<1x8x8xf32> to vector<8x8xf32>
    %130 = vector.extract_strided_slice %105 {offsets = [0, 8], sizes = [8, 8], strides = [1, 1]} : vector<8x16xf32> to vector<8x8xf32>
    %131 = arith.subf %129, %130 : vector<8x8xf32>
    %132 = tpu.concatenate %127, %131 in 1 : vector<8x8xf32>, vector<8x8xf32> -> vector<8x16xf32>
    %133 = vector.extract_strided_slice %132 {offsets = [0, 0], sizes = [1, 16], strides = [1, 1]} : vector<8x16xf32> to vector<1x16xf32>
    %134 = vector.extract_strided_slice %132 {offsets = [1, 0], sizes = [1, 16], strides = [1, 1]} : vector<8x16xf32> to vector<1x16xf32>
    %135 = vector.extract_strided_slice %132 {offsets = [2, 0], sizes = [1, 16], strides = [1, 1]} : vector<8x16xf32> to vector<1x16xf32>
    %136 = vector.extract_strided_slice %132 {offsets = [3, 0], sizes = [1, 16], strides = [1, 1]} : vector<8x16xf32> to vector<1x16xf32>
    %137 = vector.extract_strided_slice %132 {offsets = [4, 0], sizes = [1, 16], strides = [1, 1]} : vector<8x16xf32> to vector<1x16xf32>
    %138 = vector.extract_strided_slice %132 {offsets = [5, 0], sizes = [1, 16], strides = [1, 1]} : vector<8x16xf32> to vector<1x16xf32>
    %139 = vector.extract_strided_slice %132 {offsets = [6, 0], sizes = [1, 16], strides = [1, 1]} : vector<8x16xf32> to vector<1x16xf32>
    %140 = vector.extract_strided_slice %132 {offsets = [7, 0], sizes = [1, 16], strides = [1, 1]} : vector<8x16xf32> to vector<1x16xf32>
    %141 = tpu.concatenate %133, %134, %135, %136, %137, %138, %139, %140 in 1 : vector<1x16xf32>, vector<1x16xf32>, vector<1x16xf32>, vector<1x16xf32>, vector<1x16xf32>, vector<1x16xf32>, vector<1x16xf32>, vector<1x16xf32> -> vector<1x128xf32>
    %142 = tpu.concatenate %123, %141 in 0 : vector<1x128xf32>, vector<1x128xf32> -> vector<2x128xf32>
    %c0_95 = arith.constant 0 : index
    %c0_96 = arith.constant 0 : index
    %143 = vector.load %arg5[%c0_95, %c0_96] : memref<2x4xf32, #tpu.memory_space<vmem>>, vector<2x4xf32>
    %c0_97 = arith.constant 0 : index
    %c0_98 = arith.constant 0 : index
    %144 = vector.load %arg6[%c0_97, %c0_98] : memref<2x4xf32, #tpu.memory_space<vmem>>, vector<2x4xf32>
    %145 = tpu.concatenate %143, %144 in 1 : vector<2x4xf32>, vector<2x4xf32> -> vector<2x8xf32>
    %c0_99 = arith.constant 0 : index
    %c0_100 = arith.constant 0 : index
    %146 = vector.load %arg9[%c0_99, %c0_100] : memref<8x64xf32, #tpu.memory_space<vmem>>, vector<8x64xf32>
    %cst_101 = arith.constant dense<0.000000e+00> : vector<2x64xf32>
    %147 = tpu.matmul %145, %146, %cst_101 {dimension_numbers = #tpu.dot_dimension_numbers<[1], [0], [0], [1], [0, 0, 1, 1], [], []>} : vector<2x8xf32>, vector<8x64xf32>, vector<2x64xf32> -> vector<2x64xf32>
    %c0_102 = arith.constant 0 : index
    %c0_103 = arith.constant 0 : index
    %148 = vector.load %arg10[%c0_102, %c0_103] : memref<1x64xf32, #tpu.memory_space<vmem>>, vector<1x64xf32>
    %149 = vector.broadcast %148 : vector<1x64xf32> to vector<2x64xf32>
    %150 = arith.addf %147, %149 : vector<2x64xf32>
    %151 = tpu.concatenate %142, %150 in 1 : vector<2x128xf32>, vector<2x64xf32> -> vector<2x192xf32>
    %c0_104 = arith.constant 0 : index
    %c0_105 = arith.constant 0 : index
    %152 = vector.load %arg11[%c0_104, %c0_105] : memref<192x64xf32, #tpu.memory_space<vmem>>, vector<192x64xf32>
    %cst_106 = arith.constant dense<0.000000e+00> : vector<2x64xf32>
    %153 = tpu.matmul %151, %152, %cst_106 {dimension_numbers = #tpu.dot_dimension_numbers<[1], [0], [0], [1], [0, 0, 1, 1], [], []>} : vector<2x192xf32>, vector<192x64xf32>, vector<2x64xf32> -> vector<2x64xf32>
    %c0_107 = arith.constant 0 : index
    %c0_108 = arith.constant 0 : index
    %154 = vector.load %arg12[%c0_107, %c0_108] : memref<1x64xf32, #tpu.memory_space<vmem>>, vector<1x64xf32>
    %155 = vector.broadcast %154 : vector<1x64xf32> to vector<2x64xf32>
    %156 = arith.addf %153, %155 : vector<2x64xf32>
    %cst_109 = arith.constant 2.000000e+01 : f32
    %157 = vector.broadcast %cst_109 : f32 to vector<2x64xf32>
    %158 = arith.minimumf %156, %157 : vector<2x64xf32>
    %159 = math.exp %158 : vector<2x64xf32>
    %cst_110 = arith.constant 2.000000e+00 : f32
    %160 = vector.broadcast %cst_110 : f32 to vector<2x64xf32>
    %161 = arith.addf %159, %160 : vector<2x64xf32>
    %162 = arith.mulf %159, %161 : vector<2x64xf32>
    %cst_111 = arith.constant 2.000000e+00 : f32
    %163 = vector.broadcast %cst_111 : f32 to vector<2x64xf32>
    %164 = arith.addf %162, %163 : vector<2x64xf32>
    %165 = arith.divf %162, %164 : vector<2x64xf32>
    %166 = arith.mulf %156, %165 : vector<2x64xf32>
    %c0_112 = arith.constant 0 : index
    %c0_113 = arith.constant 0 : index
    %167 = vector.load %arg13[%c0_112, %c0_113] : memref<64x64xf32, #tpu.memory_space<vmem>>, vector<64x64xf32>
    %cst_114 = arith.constant dense<0.000000e+00> : vector<2x64xf32>
    %168 = tpu.matmul %166, %167, %cst_114 {dimension_numbers = #tpu.dot_dimension_numbers<[1], [0], [0], [1], [0, 0, 1, 1], [], []>} : vector<2x64xf32>, vector<64x64xf32>, vector<2x64xf32> -> vector<2x64xf32>
    %c0_115 = arith.constant 0 : index
    %c0_116 = arith.constant 0 : index
    %169 = vector.load %arg14[%c0_115, %c0_116] : memref<1x64xf32, #tpu.memory_space<vmem>>, vector<1x64xf32>
    %170 = vector.broadcast %169 : vector<1x64xf32> to vector<2x64xf32>
    %171 = arith.addf %168, %170 : vector<2x64xf32>
    %cst_117 = arith.constant 2.000000e+01 : f32
    %172 = vector.broadcast %cst_117 : f32 to vector<2x64xf32>
    %173 = arith.minimumf %171, %172 : vector<2x64xf32>
    %174 = math.exp %173 : vector<2x64xf32>
    %cst_118 = arith.constant 2.000000e+00 : f32
    %175 = vector.broadcast %cst_118 : f32 to vector<2x64xf32>
    %176 = arith.addf %174, %175 : vector<2x64xf32>
    %177 = arith.mulf %174, %176 : vector<2x64xf32>
    %cst_119 = arith.constant 2.000000e+00 : f32
    %178 = vector.broadcast %cst_119 : f32 to vector<2x64xf32>
    %179 = arith.addf %177, %178 : vector<2x64xf32>
    %180 = arith.divf %177, %179 : vector<2x64xf32>
    %181 = arith.mulf %171, %180 : vector<2x64xf32>
    %c0_120 = arith.constant 0 : index
    %c0_121 = arith.constant 0 : index
    %182 = vector.load %arg15[%c0_120, %c0_121] : memref<64x1xf32, #tpu.memory_space<vmem>>, vector<64x1xf32>
    %cst_122 = arith.constant dense<0.000000e+00> : vector<2x1xf32>
    %183 = tpu.matmul %181, %182, %cst_122 {dimension_numbers = #tpu.dot_dimension_numbers<[1], [0], [0], [1], [0, 0, 1, 1], [], []>} : vector<2x64xf32>, vector<64x1xf32>, vector<2x1xf32> -> vector<2x1xf32>
    %c0_123 = arith.constant 0 : index
    %c0_124 = arith.constant 0 : index
    %184 = vector.load %arg16[%c0_123, %c0_124] : memref<1x1xf32, #tpu.memory_space<vmem>>, vector<1x1xf32>
    %185 = vector.broadcast %184 : vector<1x1xf32> to vector<2x1xf32>
    %186 = arith.addf %183, %185 : vector<2x1xf32>
    %c0_125 = arith.constant 0 : index
    %c0_126 = arith.constant 0 : index
    %187 = vector.load %arg17[%c0_125, %c0_126] : memref<2x1xf32, #tpu.memory_space<vmem>>, vector<2x1xf32>
    tpu.vector_store %arg17[%c0_125, %c0_126], %186 {strides = array<i32>} : memref<2x1xf32, #tpu.memory_space<vmem>>, vector<2x1xf32>,
    return
  }
  func.func @transform_0(%arg0: i32) -> (i32, i32, i32, i32) {
    %c0_i32 = arith.constant 0 : i32
    %c0_i32_0 = arith.constant 0 : i32
    %c0_i32_1 = arith.constant 0 : i32
    %c0_i32_2 = arith.constant 0 : i32
    %c0_i32_3 = arith.constant 0 : i32
    return %c0_i32, %c0_i32_0, %c0_i32_1, %c0_i32_2 : i32, i32, i32, i32
  }
  func.func @transform_1(%arg0: i32) -> (i32, i32, i32, i32) {
    %c0_i32 = arith.constant 0 : i32
    %c0_i32_0 = arith.constant 0 : i32
    %c0_i32_1 = arith.constant 0 : i32
    %c0_i32_2 = arith.constant 0 : i32
    %c0_i32_3 = arith.constant 0 : i32
    return %c0_i32, %c0_i32_0, %c0_i32_1, %c0_i32_2 : i32, i32, i32, i32
  }
  func.func @transform_2(%arg0: i32) -> (i32, i32, i32) {
    %c0_i32 = arith.constant 0 : i32
    %c0_i32_0 = arith.constant 0 : i32
    %c0_i32_1 = arith.constant 0 : i32
    %c0_i32_2 = arith.constant 0 : i32
    return %c0_i32, %c0_i32_0, %c0_i32_1 : i32, i32, i32
  }
  func.func @transform_3(%arg0: i32) -> (i32, i32, i32) {
    %c0_i32 = arith.constant 0 : i32
    %c0_i32_0 = arith.constant 0 : i32
    %c0_i32_1 = arith.constant 0 : i32
    %c0_i32_2 = arith.constant 0 : i32
    return %c0_i32, %c0_i32_0, %c0_i32_1 : i32, i32, i32
  }
  func.func @transform_4(%arg0: i32) -> (i32, i32) {
    %c0_i32 = arith.constant 0 : i32
    %c0_i32_0 = arith.constant 0 : i32
    %c0_i32_1 = arith.constant 0 : i32
    return %c0_i32, %c0_i32_0 : i32, i32
  }
  func.func @transform_5(%arg0: i32) -> (i32, i32) {
    %c0_i32 = arith.constant 0 : i32
    %c0_i32_0 = arith.constant 0 : i32
    %c0_i32_1 = arith.constant 0 : i32
    return %c0_i32, %c0_i32_0 : i32, i32
  }
  func.func @transform_6(%arg0: i32) -> (i32, i32, i32) {
    %c0_i32 = arith.constant 0 : i32
    %c0_i32_0 = arith.constant 0 : i32
    %c0_i32_1 = arith.constant 0 : i32
    %c0_i32_2 = arith.constant 0 : i32
    return %c0_i32, %c0_i32_0, %c0_i32_1 : i32, i32, i32
  }
  func.func @transform_7(%arg0: i32) -> (i32, i32, i32) {
    %c0_i32 = arith.constant 0 : i32
    %c0_i32_0 = arith.constant 0 : i32
    %c0_i32_1 = arith.constant 0 : i32
    %c0_i32_2 = arith.constant 0 : i32
    return %c0_i32, %c0_i32_0, %c0_i32_1 : i32, i32, i32
  }
  func.func @transform_8(%arg0: i32) -> (i32, i32) {
    %c0_i32 = arith.constant 0 : i32
    %c0_i32_0 = arith.constant 0 : i32
    %c0_i32_1 = arith.constant 0 : i32
    return %c0_i32, %c0_i32_0 : i32, i32
  }
  func.func @transform_9(%arg0: i32) -> (i32, i32) {
    %c0_i32 = arith.constant 0 : i32
    %c0_i32_0 = arith.constant 0 : i32
    %c0_i32_1 = arith.constant 0 : i32
    return %c0_i32, %c0_i32_0 : i32, i32
  }
  func.func @transform_10(%arg0: i32) -> (i32, i32) {
    %c0_i32 = arith.constant 0 : i32
    %c0_i32_0 = arith.constant 0 : i32
    %c0_i32_1 = arith.constant 0 : i32
    return %c0_i32, %c0_i32_0 : i32, i32
  }
  func.func @transform_11(%arg0: i32) -> (i32, i32) {
    %c0_i32 = arith.constant 0 : i32
    %c0_i32_0 = arith.constant 0 : i32
    %c0_i32_1 = arith.constant 0 : i32
    return %c0_i32, %c0_i32_0 : i32, i32
  }
  func.func @transform_12(%arg0: i32) -> (i32, i32) {
    %c0_i32 = arith.constant 0 : i32
    %c0_i32_0 = arith.constant 0 : i32
    %c0_i32_1 = arith.constant 0 : i32
    return %c0_i32, %c0_i32_0 : i32, i32
  }
  func.func @transform_13(%arg0: i32) -> (i32, i32) {
    %c0_i32 = arith.constant 0 : i32
    %c0_i32_0 = arith.constant 0 : i32
    %c0_i32_1 = arith.constant 0 : i32
    return %c0_i32, %c0_i32_0 : i32, i32
  }
  func.func @transform_14(%arg0: i32) -> (i32, i32) {
    %c0_i32 = arith.constant 0 : i32
    %c0_i32_0 = arith.constant 0 : i32
    %c0_i32_1 = arith.constant 0 : i32
    return %c0_i32, %c0_i32_0 : i32, i32
  }
  func.func @transform_15(%arg0: i32) -> (i32, i32) {
    %c0_i32 = arith.constant 0 : i32
    %c0_i32_0 = arith.constant 0 : i32
    %c0_i32_1 = arith.constant 0 : i32
    return %c0_i32, %c0_i32_0 : i32, i32
  }
  func.func @transform_16(%arg0: i32) -> (i32, i32) {
    %c0_i32 = arith.constant 0 : i32
    %c0_i32_0 = arith.constant 0 : i32
    %c0_i32_1 = arith.constant 0 : i32
    return %c0_i32, %c0_i32_0 : i32, i32
  }
}

</mosaic_0001>

<llo_original>
// kernel: tpu_custom_call.1
$region0: #{tpu_custom_call.1}
  #allocation0 [shape = 'u32[]', space=smem, size = 0x4, offset = 0x4, fixed_abs, tag = 'smem constant byte address 0x4 - core index']
  #allocation1 [shape = 'u32[144,128]{1,0:T(1,128)}', space=vmem, size = 0x12000, scoped, tag = 'internal scratch']
  #allocation2 [shape = 'f32[1,1]{1,0:T(1,128)S(1)}', space=vmem, size = 0x200, scoped, tag = 'scoped memory for tpu_custom_call.1']
  %s0 = inlined_call_operand.vmem [shape: f32[2,3,8,8], index: 0, kind: input, shape index: {}]
  %s1 = inlined_call_operand.vmem [shape: f32[2,3,8,8], index: 1, kind: input, shape index: {}]
  %s2 = inlined_call_operand.vmem [shape: f32[2,8,8], index: 2, kind: input, shape index: {}]
  %s3 = inlined_call_operand.vmem [shape: f32[2,8,8], index: 3, kind: input, shape index: {}]
  %s4 = inlined_call_operand.vmem [shape: f32[2,4], index: 4, kind: input, shape index: {}]
  %s5 = inlined_call_operand.vmem [shape: f32[2,4], index: 5, kind: input, shape index: {}]
  %s6 = inlined_call_operand.vmem [shape: f32[3,8,8], index: 6, kind: input, shape index: {}]
  %s7 = inlined_call_operand.vmem [shape: f32[3,8,8], index: 7, kind: input, shape index: {}]
  %s8 = inlined_call_operand.vmem [shape: f32[8,64], index: 8, kind: input, shape index: {}]
  %s9 = inlined_call_operand.vmem [shape: f32[1,64], index: 9, kind: input, shape index: {}]
  %s10 = inlined_call_operand.vmem [shape: f32[192,64], index: 10, kind: input, shape index: {}]
  %s11 = inlined_call_operand.vmem [shape: f32[1,64], index: 11, kind: input, shape index: {}]
  %s12 = inlined_call_operand.vmem [shape: f32[64,64], index: 12, kind: input, shape index: {}]
  %s13 = inlined_call_operand.vmem [shape: f32[1,64], index: 13, kind: input, shape index: {}]
  %s14 = inlined_call_operand.vmem [shape: f32[64,1], index: 14, kind: input, shape index: {}]
  %s15 = inlined_call_operand.<no memory space> [shape: f32[1,1], index: 15, kind: input, shape index: {}]
  %s16 = inlined_call_operand.vmem [shape: f32[2,1], index: 16, kind: output, shape index: {}]
  %s17 = sld [smem:[#allocation0]]
  $region74: #{tpu_custom_call.1} parent=0
    _
  %s19 = ssub.s32 1, %s17
  %s20 = scalar_select 0, %s19, %s17
  %v21 = vstv %s15
  %22 = vst [vmem:[#allocation2] sm:$0x1] %v21
  // Predicated region
  $region2: #{tpu_custom_call.1} parent=0 // pred_check
    _
  $region3: #{tpu_custom_call.1} parent=0 // pred_check_branch
    %24 = sbr.rel (0) target = $region5
  $region4: #{tpu_custom_call.1} parent=0 // pred_region
    _
  $region5: #{tpu_custom_call.1} parent=0 // pred_fallthru
    _
  // Predicated region
  $region6: #{tpu_custom_call.1} parent=0 // pred_check
    _
  $region7: #{tpu_custom_call.1} parent=0 // pred_check_branch
    %26 = sbr.rel (0) target = $region9
  $region8: #{tpu_custom_call.1} parent=0 // pred_region
    _
  $region9: #{tpu_custom_call.1} parent=0 // pred_fallthru
    _
  // Predicated region
  $region10: #{tpu_custom_call.1} parent=0 // pred_check
    _
  $region11: #{tpu_custom_call.1} parent=0 // pred_check_branch
    %28 = sbr.rel (0) target = $region13
  $region12: #{tpu_custom_call.1} parent=0 // pred_region
    _
  $region13: #{tpu_custom_call.1} parent=0 // pred_fallthru
    _
  // Predicated region
  $region14: #{tpu_custom_call.1} parent=0 // pred_check
    _
  $region15: #{tpu_custom_call.1} parent=0 // pred_check_branch
    %30 = sbr.rel (0) target = $region17
  $region16: #{tpu_custom_call.1} parent=0 // pred_region
    _
  $region17: #{tpu_custom_call.1} parent=0 // pred_fallthru
    _
  // Predicated region
  $region18: #{tpu_custom_call.1} parent=0 // pred_check
    _
  $region19: #{tpu_custom_call.1} parent=0 // pred_check_branch
    %32 = sbr.rel (0) target = $region21
  $region20: #{tpu_custom_call.1} parent=0 // pred_region
    _
  $region21: #{tpu_custom_call.1} parent=0 // pred_fallthru
    _
  // Predicated region
  $region22: #{tpu_custom_call.1} parent=0 // pred_check
    _
  $region23: #{tpu_custom_call.1} parent=0 // pred_check_branch
    %34 = sbr.rel (0) target = $region25
  $region24: #{tpu_custom_call.1} parent=0 // pred_region
    _
  $region25: #{tpu_custom_call.1} parent=0 // pred_fallthru
    _
  // Predicated region
  $region26: #{tpu_custom_call.1} parent=0 // pred_check
    _
  $region27: #{tpu_custom_call.1} parent=0 // pred_check_branch
    %36 = sbr.rel (0) target = $region29
  $region28: #{tpu_custom_call.1} parent=0 // pred_region
    _
  $region29: #{tpu_custom_call.1} parent=0 // pred_fallthru
    _
  // Predicated region
  $region30: #{tpu_custom_call.1} parent=0 // pred_check
    _
  $region31: #{tpu_custom_call.1} parent=0 // pred_check_branch
    %38 = sbr.rel (0) target = $region33
  $region32: #{tpu_custom_call.1} parent=0 // pred_region
    _
  $region33: #{tpu_custom_call.1} parent=0 // pred_fallthru
    _
  // Predicated region
  $region34: #{tpu_custom_call.1} parent=0 // pred_check
    _
  $region35: #{tpu_custom_call.1} parent=0 // pred_check_branch
    %40 = sbr.rel (0) target = $region37
  $region36: #{tpu_custom_call.1} parent=0 // pred_region
    _
  $region37: #{tpu_custom_call.1} parent=0 // pred_fallthru
    _
  // Predicated region
  $region38: #{tpu_custom_call.1} parent=0 // pred_check
    _
  $region39: #{tpu_custom_call.1} parent=0 // pred_check_branch
    %42 = sbr.rel (0) target = $region41
  $region40: #{tpu_custom_call.1} parent=0 // pred_region
    _
  $region41: #{tpu_custom_call.1} parent=0 // pred_fallthru
    _
  // Predicated region
  $region42: #{tpu_custom_call.1} parent=0 // pred_check
    _
  $region43: #{tpu_custom_call.1} parent=0 // pred_check_branch
    %44 = sbr.rel (0) target = $region45
  $region44: #{tpu_custom_call.1} parent=0 // pred_region
    _
  $region45: #{tpu_custom_call.1} parent=0 // pred_fallthru
    _
  // Predicated region
  $region46: #{tpu_custom_call.1} parent=0 // pred_check
    _
  $region47: #{tpu_custom_call.1} parent=0 // pred_check_branch
    %46 = sbr.rel (0) target = $region49
  $region48: #{tpu_custom_call.1} parent=0 // pred_region
    _
  $region49: #{tpu_custom_call.1} parent=0 // pred_fallthru
    _
  // Predicated region
  $region50: #{tpu_custom_call.1} parent=0 // pred_check
    _
  $region51: #{tpu_custom_call.1} parent=0 // pred_check_branch
    %48 = sbr.rel (0) target = $region53
  $region52: #{tpu_custom_call.1} parent=0 // pred_region
    _
  $region53: #{tpu_custom_call.1} parent=0 // pred_fallthru
    _
  // Predicated region
  $region54: #{tpu_custom_call.1} parent=0 // pred_check
    _
  $region55: #{tpu_custom_call.1} parent=0 // pred_check_branch
    %50 = sbr.rel (0) target = $region57
  $region56: #{tpu_custom_call.1} parent=0 // pred_region
    _
  $region57: #{tpu_custom_call.1} parent=0 // pred_fallthru
    _
  // Predicated region
  $region58: #{tpu_custom_call.1} parent=0 // pred_check
    _
  $region59: #{tpu_custom_call.1} parent=0 // pred_check_branch
    %52 = sbr.rel (0) target = $region61
  $region60: #{tpu_custom_call.1} parent=0 // pred_region
    _
  $region61: #{tpu_custom_call.1} parent=0 // pred_fallthru
    _
  // Predicated region
  $region62: #{tpu_custom_call.1} parent=0 // pred_check
    _
  $region63: #{tpu_custom_call.1} parent=0 // pred_check_branch
    %54 = sbr.rel (0) target = $region65
  $region64: #{tpu_custom_call.1} parent=0 // pred_region
    _
  $region65: #{tpu_custom_call.1} parent=0 // pred_fallthru
    _
  %v55 = vld [vmem:[%s0] sm:$0xff]
  %s56 = scalar_lea.vmem %s0, 24
  %v57 = vld [vmem:[%s56] sm:$0xff]
  %59 = vrot.lane.b32.xlu0 %v57, 8
  %v60 = vpop.permute.xlu0 %59
  %vm62 = vcmask 64512
  %v63 = vsel %vm62, %v55, %v60
  %v64 = vld [vmem:[%s1] sm:$0xff]
  %s65 = scalar_lea.vmem %s1, 24
  %v66 = vld [vmem:[%s65] sm:$0xff]
  %68 = vrot.lane.b32.xlu0 %v66, 8
  %v69 = vpop.permute.xlu0 %68
  %v71 = vsel %vm62, %v64, %v69
  %v72 = vld [vmem:[%s6] sm:$0xff]
  %v73 = vld [vmem:[%s7] sm:$0xff]
  %v75 = vsel %vm62, %v72, 0
  %77 = vmatprep.subr.mxu0 0.0
  %78 = vmatpush1.msra.mxu0 %v63
  %79 = vmatprep.subr.mxu0 0.0
  %80 = vmatpush1.msra.mxu0 0.0
  %81 = vmatprep.subr.mxu0 0.0
  %82 = vmatpush1.msra.mxu0 0.0
  %83 = vmatprep.subr.mxu0 0.0
  %84 = vmatpush1.msra.mxu0 0.0
  %85 = vmatprep.subr.mxu0 0.0
  %86 = vmatpush1.msra.mxu0 0.0
  %87 = vmatprep.subr.mxu0 0.0
  %88 = vmatpush1.msra.mxu0 0.0
  %89 = vmatprep.subr.mxu0 0.0
  %90 = vmatpush1.msra.mxu0 0.0
  %91 = vmatprep.subr.mxu0 0.0
  %92 = vmatpush1.msra.mxu0 0.0
  %93 = vmatprep.subr.mxu0 0.0
  %94 = vmatpush1.msra.mxu0 0.0
  %95 = vmatprep.subr.mxu0 0.0
  %96 = vmatpush1.msra.mxu0 0.0
  %97 = vmatprep.subr.mxu0 0.0
  %98 = vmatpush1.msra.mxu0 0.0
  %99 = vmatprep.subr.mxu0 0.0
  %100 = vmatpush1.msra.mxu0 0.0
  %101 = vmatprep.subr.mxu0 0.0
  %102 = vmatpush1.msra.mxu0 0.0
  %103 = vmatprep.subr.mxu0 0.0
  %104 = vmatpush1.msra.mxu0 0.0
  %105 = vmatprep.subr.mxu0 0.0
  %106 = vmatpush1.msra.mxu0 0.0
  %107 = vmatprep.subr.mxu0 0.0
  %108 = vmatpush1.msra.mxu0 0.0
  %109 = vmatprep.subr.mxu0 0.0
  %110 = vmatpush1.msra.mxu0 0.0
  %111 = vmatprep.subr.mxu0 0.0
  %112 = vmatpush1.msra.mxu0 0.0
  %113 = vmatprep.subr.mxu0 0.0
  %114 = vmatpush1.msra.mxu0 0.0
  %115 = vmatprep.subr.mxu0 0.0
  %116 = vmatpush1.msra.mxu0 0.0
  %117 = vmatprep.subr.mxu0 0.0
  %118 = vmatpush1.msra.mxu0 0.0
  %119 = vmatprep.subr.mxu0 0.0
  %120 = vmatpush1.msra.mxu0 0.0
  %121 = vmatprep.subr.mxu0 0.0
  %122 = vmatpush1.msra.mxu0 0.0
  %123 = vmatprep.subr.mxu0 0.0
  %124 = vmatpush1.msra.mxu0 0.0
  %125 = vmatprep.subr.mxu0 0.0
  %126 = vmatpush1.msra.mxu0 0.0
  %127 = vmatprep.subr.mxu0 0.0
  %128 = vmatpush1.msra.mxu0 0.0
  %129 = vmatprep.subr.mxu0 0.0
  %130 = vmatpush1.msra.mxu0 0.0
  %131 = vmatprep.subr.mxu0 0.0
  %132 = vmatpush1.msra.mxu0 0.0
  %133 = vmatprep.subr.mxu0 0.0
  %134 = vmatpush1.msra.mxu0 0.0
  %135 = vmatprep.subr.mxu0 0.0
  %136 = vmatpush1.msra.mxu0 0.0
  %137 = vmatprep.subr.mxu0 0.0
  %138 = vmatpush1.msra.mxu0 0.0
  %139 = vmatprep.subr.mxu0 0.0
  %140 = vmatpush1.msra.mxu0 0.0
  %141 = vmatprep.mubr.f32.mxu0 0.0
  %142 = vmatmul.mubr.f32.gmra.mrb[0].mxu0 %v75
  %v143 = vpop.f32.mrb[0].mxu0
  %v144 = vadd.f32 0.0, %v143
  %v145 = vpop.f32.mrb[0].mxu0
  %146 = vdwg.mxu0
  %v148 = vsel %vm62, %v73, 0
  %150 = vmatprep.subr.mxu0 0.0
  %151 = vmatpush1.msra.mxu0 %v71
  %152 = vmatprep.subr.mxu0 0.0
  %153 = vmatpush1.msra.mxu0 0.0
  %154 = vmatprep.subr.mxu0 0.0
  %155 = vmatpush1.msra.mxu0 0.0
  %156 = vmatprep.subr.mxu0 0.0
  %157 = vmatpush1.msra.mxu0 0.0
  %158 = vmatprep.subr.mxu0 0.0
  %159 = vmatpush1.msra.mxu0 0.0
  %160 = vmatprep.subr.mxu0 0.0
  %161 = vmatpush1.msra.mxu0 0.0
  %162 = vmatprep.subr.mxu0 0.0
  %163 = vmatpush1.msra.mxu0 0.0
  %164 = vmatprep.subr.mxu0 0.0
  %165 = vmatpush1.msra.mxu0 0.0
  %166 = vmatprep.subr.mxu0 0.0
  %167 = vmatpush1.msra.mxu0 0.0
  %168 = vmatprep.subr.mxu0 0.0
  %169 = vmatpush1.msra.mxu0 0.0
  %170 = vmatprep.subr.mxu0 0.0
  %171 = vmatpush1.msra.mxu0 0.0
  %172 = vmatprep.subr.mxu0 0.0
  %173 = vmatpush1.msra.mxu0 0.0
  %174 = vmatprep.subr.mxu0 0.0
  %175 = vmatpush1.msra.mxu0 0.0
  %176 = vmatprep.subr.mxu0 0.0
  %177 = vmatpush1.msra.mxu0 0.0
  %178 = vmatprep.subr.mxu0 0.0
  %179 = vmatpush1.msra.mxu0 0.0
  %180 = vmatprep.subr.mxu0 0.0
  %181 = vmatpush1.msra.mxu0 0.0
  %182 = vmatprep.subr.mxu0 0.0
  %183 = vmatpush1.msra.mxu0 0.0
  %184 = vmatprep.subr.mxu0 0.0
  %185 = vmatpush1.msra.mxu0 0.0
  %186 = vmatprep.subr.mxu0 0.0
  %187 = vmatpush1.msra.mxu0 0.0
  %188 = vmatprep.subr.mxu0 0.0
  %189 = vmatpush1.msra.mxu0 0.0
  %190 = vmatprep.subr.mxu0 0.0
  %191 = vmatpush1.msra.mxu0 0.0
  %192 = vmatprep.subr.mxu0 0.0
  %193 = vmatpush1.msra.mxu0 0.0
  %194 = vmatprep.subr.mxu0 0.0
  %195 = vmatpush1.msra.mxu0 0.0
  %196 = vmatprep.subr.mxu0 0.0
  %197 = vmatpush1.msra.mxu0 0.0
  %198 = vmatprep.subr.mxu0 0.0
  %199 = vmatpush1.msra.mxu0 0.0
  %200 = vmatprep.subr.mxu0 0.0
  %201 = vmatpush1.msra.mxu0 0.0
  %202 = vmatprep.subr.mxu0 0.0
  %203 = vmatpush1.msra.mxu0 0.0
  %204 = vmatprep.subr.mxu0 0.0
  %205 = vmatpush1.msra.mxu0 0.0
  %206 = vmatprep.subr.mxu0 0.0
  %207 = vmatpush1.msra.mxu0 0.0
  %208 = vmatprep.subr.mxu0 0.0
  %209 = vmatpush1.msra.mxu0 0.0
  %210 = vmatprep.subr.mxu0 0.0
  %211 = vmatpush1.msra.mxu0 0.0
  %212 = vmatprep.subr.mxu0 0.0
  %213 = vmatpush1.msra.mxu0 0.0
  %214 = vmatprep.mubr.f32.mxu0 0.0
  %215 = vmatmul.mubr.f32.gmra.mrb[0].mxu0 %v148
  %v216 = vpop.f32.mrb[0].mxu0
  %v217 = vadd.f32 0.0, %v216
  %v218 = vpop.f32.mrb[0].mxu0
  %219 = vdwg.mxu0
  %v220 = vadd.f32 %v72, %v73
  %v221 = vadd.f32 %v63, %v71
  %v223 = vsel %vm62, %v220, 0
  %225 = vmatprep.subr.mxu0 0.0
  %226 = vmatpush1.msra.mxu0 %v221
  %227 = vmatprep.subr.mxu0 0.0
  %228 = vmatpush1.msra.mxu0 0.0
  %229 = vmatprep.subr.mxu0 0.0
  %230 = vmatpush1.msra.mxu0 0.0
  %231 = vmatprep.subr.mxu0 0.0
  %232 = vmatpush1.msra.mxu0 0.0
  %233 = vmatprep.subr.mxu0 0.0
  %234 = vmatpush1.msra.mxu0 0.0
  %235 = vmatprep.subr.mxu0 0.0
  %236 = vmatpush1.msra.mxu0 0.0
  %237 = vmatprep.subr.mxu0 0.0
  %238 = vmatpush1.msra.mxu0 0.0
  %239 = vmatprep.subr.mxu0 0.0
  %240 = vmatpush1.msra.mxu0 0.0
  %241 = vmatprep.subr.mxu0 0.0
  %242 = vmatpush1.msra.mxu0 0.0
  %243 = vmatprep.subr.mxu0 0.0
  %244 = vmatpush1.msra.mxu0 0.0
  %245 = vmatprep.subr.mxu0 0.0
  %246 = vmatpush1.msra.mxu0 0.0
  %247 = vmatprep.subr.mxu0 0.0
  %248 = vmatpush1.msra.mxu0 0.0
  %249 = vmatprep.subr.mxu0 0.0
  %250 = vmatpush1.msra.mxu0 0.0
  %251 = vmatprep.subr.mxu0 0.0
  %252 = vmatpush1.msra.mxu0 0.0
  %253 = vmatprep.subr.mxu0 0.0
  %254 = vmatpush1.msra.mxu0 0.0
  %255 = vmatprep.subr.mxu0 0.0
  %256 = vmatpush1.msra.mxu0 0.0
  %257 = vmatprep.subr.mxu0 0.0
  %258 = vmatpush1.msra.mxu0 0.0
  %259 = vmatprep.subr.mxu0 0.0
  %260 = vmatpush1.msra.mxu0 0.0
  %261 = vmatprep.subr.mxu0 0.0
  %262 = vmatpush1.msra.mxu0 0.0
  %263 = vmatprep.subr.mxu0 0.0
  %264 = vmatpush1.msra.mxu0 0.0
  %265 = vmatprep.subr.mxu0 0.0
  %266 = vmatpush1.msra.mxu0 0.0
  %267 = vmatprep.subr.mxu0 0.0
  %268 = vmatpush1.msra.mxu0 0.0
  %269 = vmatprep.subr.mxu0 0.0
  %270 = vmatpush1.msra.mxu0 0.0
  %271 = vmatprep.subr.mxu0 0.0
  %272 = vmatpush1.msra.mxu0 0.0
  %273 = vmatprep.subr.mxu0 0.0
  %274 = vmatpush1.msra.mxu0 0.0
  %275 = vmatprep.subr.mxu0 0.0
  %276 = vmatpush1.msra.mxu0 0.0
  %277 = vmatprep.subr.mxu0 0.0
  %278 = vmatpush1.msra.mxu0 0.0
  %279 = vmatprep.subr.mxu0 0.0
  %280 = vmatpush1.msra.mxu0 0.0
  %281 = vmatprep.subr.mxu0 0.0
  %282 = vmatpush1.msra.mxu0 0.0
  %283 = vmatprep.subr.mxu0 0.0
  %284 = vmatpush1.msra.mxu0 0.0
  %285 = vmatprep.subr.mxu0 0.0
  %286 = vmatpush1.msra.mxu0 0.0
  %287 = vmatprep.subr.mxu0 0.0
  %288 = vmatpush1.msra.mxu0 0.0
  %289 = vmatprep.mubr.f32.mxu0 0.0
  %290 = vmatmul.mubr.f32.gmra.mrb[0].mxu0 %v223
  %v291 = vpop.f32.mrb[0].mxu0
  %v292 = vadd.f32 0.0, %v291
  %v293 = vpop.f32.mrb[0].mxu0
  %294 = vdwg.mxu0
  %v295 = vsub.f32 %v144, %v217
  %v296 = vsub.f32 %v292, %v144
  %v297 = vsub.f32 %v296, %v217
  %s298 = scalar_lea.vmem %s0, 8
  %v299 = vld [vmem:[%s298] sm:$0xff]
  %s300 = scalar_lea.vmem %s1, 8
  %v301 = vld [vmem:[%s300] sm:$0xff]
  %v303 = vsel %vm62, %v299, 0
  %305 = vmatprep.subr.mxu0 0.0
  %306 = vmatpush1.msra.mxu0 %v295
  %307 = vmatprep.subr.mxu0 0.0
  %308 = vmatpush1.msra.mxu0 0.0
  %309 = vmatprep.subr.mxu0 0.0
  %310 = vmatpush1.msra.mxu0 0.0
  %311 = vmatprep.subr.mxu0 0.0
  %312 = vmatpush1.msra.mxu0 0.0
  %313 = vmatprep.subr.mxu0 0.0
  %314 = vmatpush1.msra.mxu0 0.0
  %315 = vmatprep.subr.mxu0 0.0
  %316 = vmatpush1.msra.mxu0 0.0
  %317 = vmatprep.subr.mxu0 0.0
  %318 = vmatpush1.msra.mxu0 0.0
  %319 = vmatprep.subr.mxu0 0.0
  %320 = vmatpush1.msra.mxu0 0.0
  %321 = vmatprep.subr.mxu0 0.0
  %322 = vmatpush1.msra.mxu0 0.0
  %323 = vmatprep.subr.mxu0 0.0
  %324 = vmatpush1.msra.mxu0 0.0
  %325 = vmatprep.subr.mxu0 0.0
  %326 = vmatpush1.msra.mxu0 0.0
  %327 = vmatprep.subr.mxu0 0.0
  %328 = vmatpush1.msra.mxu0 0.0
  %329 = vmatprep.subr.mxu0 0.0
  %330 = vmatpush1.msra.mxu0 0.0
  %331 = vmatprep.subr.mxu0 0.0
  %332 = vmatpush1.msra.mxu0 0.0
  %333 = vmatprep.subr.mxu0 0.0
  %334 = vmatpush1.msra.mxu0 0.0
  %335 = vmatprep.subr.mxu0 0.0
  %336 = vmatpush1.msra.mxu0 0.0
  %337 = vmatprep.subr.mxu0 0.0
  %338 = vmatpush1.msra.mxu0 0.0
  %339 = vmatprep.subr.mxu0 0.0
  %340 = vmatpush1.msra.mxu0 0.0
  %341 = vmatprep.subr.mxu0 0.0
  %342 = vmatpush1.msra.mxu0 0.0
  %343 = vmatprep.subr.mxu0 0.0
  %344 = vmatpush1.msra.mxu0 0.0
  %345 = vmatprep.subr.mxu0 0.0
  %346 = vmatpush1.msra.mxu0 0.0
  %347 = vmatprep.subr.mxu0 0.0
  %348 = vmatpush1.msra.mxu0 0.0
  %349 = vmatprep.subr.mxu0 0.0
  %350 = vmatpush1.msra.mxu0 0.0
  %351 = vmatprep.subr.mxu0 0.0
  %352 = vmatpush1.msra.mxu0 0.0
  %353 = vmatprep.subr.mxu0 0.0
  %354 = vmatpush1.msra.mxu0 0.0
  %355 = vmatprep.subr.mxu0 0.0
  %356 = vmatpush1.msra.mxu0 0.0
  %357 = vmatprep.subr.mxu0 0.0
  %358 = vmatpush1.msra.mxu0 0.0
  %359 = vmatprep.subr.mxu0 0.0
  %360 = vmatpush1.msra.mxu0 0.0
  %361 = vmatprep.subr.mxu0 0.0
  %362 = vmatpush1.msra.mxu0 0.0
  %363 = vmatprep.subr.mxu0 0.0
  %364 = vmatpush1.msra.mxu0 0.0
  %365 = vmatprep.subr.mxu0 0.0
  %366 = vmatpush1.msra.mxu0 0.0
  %367 = vmatprep.subr.mxu0 0.0
  %368 = vmatpush1.msra.mxu0 0.0
  %369 = vmatprep.mubr.f32.mxu0 0.0
  %370 = vmatmul.mubr.f32.gmra.mrb[0].mxu0 %v303
  %v371 = vpop.f32.mrb[0].mxu0
  %v372 = vadd.f32 0.0, %v371
  %v373 = vpop.f32.mrb[0].mxu0
  %374 = vdwg.mxu0
  %v376 = vsel %vm62, %v301, 0
  %378 = vmatprep.subr.mxu0 0.0
  %379 = vmatpush1.msra.mxu0 %v297
  %380 = vmatprep.subr.mxu0 0.0
  %381 = vmatpush1.msra.mxu0 0.0
  %382 = vmatprep.subr.mxu0 0.0
  %383 = vmatpush1.msra.mxu0 0.0
  %384 = vmatprep.subr.mxu0 0.0
  %385 = vmatpush1.msra.mxu0 0.0
  %386 = vmatprep.subr.mxu0 0.0
  %387 = vmatpush1.msra.mxu0 0.0
  %388 = vmatprep.subr.mxu0 0.0
  %389 = vmatpush1.msra.mxu0 0.0
  %390 = vmatprep.subr.mxu0 0.0
  %391 = vmatpush1.msra.mxu0 0.0
  %392 = vmatprep.subr.mxu0 0.0
  %393 = vmatpush1.msra.mxu0 0.0
  %394 = vmatprep.subr.mxu0 0.0
  %395 = vmatpush1.msra.mxu0 0.0
  %396 = vmatprep.subr.mxu0 0.0
  %397 = vmatpush1.msra.mxu0 0.0
  %398 = vmatprep.subr.mxu0 0.0
  %399 = vmatpush1.msra.mxu0 0.0
  %400 = vmatprep.subr.mxu0 0.0
  %401 = vmatpush1.msra.mxu0 0.0
  %402 = vmatprep.subr.mxu0 0.0
  %403 = vmatpush1.msra.mxu0 0.0
  %404 = vmatprep.subr.mxu0 0.0
  %405 = vmatpush1.msra.mxu0 0.0
  %406 = vmatprep.subr.mxu0 0.0
  %407 = vmatpush1.msra.mxu0 0.0
  %408 = vmatprep.subr.mxu0 0.0
  %409 = vmatpush1.msra.mxu0 0.0
  %410 = vmatprep.subr.mxu0 0.0
  %411 = vmatpush1.msra.mxu0 0.0
  %412 = vmatprep.subr.mxu0 0.0
  %413 = vmatpush1.msra.mxu0 0.0
  %414 = vmatprep.subr.mxu0 0.0
  %415 = vmatpush1.msra.mxu0 0.0
  %416 = vmatprep.subr.mxu0 0.0
  %417 = vmatpush1.msra.mxu0 0.0
  %418 = vmatprep.subr.mxu0 0.0
  %419 = vmatpush1.msra.mxu0 0.0
  %420 = vmatprep.subr.mxu0 0.0
  %421 = vmatpush1.msra.mxu0 0.0
  %422 = vmatprep.subr.mxu0 0.0
  %423 = vmatpush1.msra.mxu0 0.0
  %424 = vmatprep.subr.mxu0 0.0
  %425 = vmatpush1.msra.mxu0 0.0
  %426 = vmatprep.subr.mxu0 0.0
  %427 = vmatpush1.msra.mxu0 0.0
  %428 = vmatprep.subr.mxu0 0.0
  %429 = vmatpush1.msra.mxu0 0.0
  %430 = vmatprep.subr.mxu0 0.0
  %431 = vmatpush1.msra.mxu0 0.0
  %432 = vmatprep.subr.mxu0 0.0
  %433 = vmatpush1.msra.mxu0 0.0
  %434 = vmatprep.subr.mxu0 0.0
  %435 = vmatpush1.msra.mxu0 0.0
  %436 = vmatprep.subr.mxu0 0.0
  %437 = vmatpush1.msra.mxu0 0.0
  %438 = vmatprep.subr.mxu0 0.0
  %439 = vmatpush1.msra.mxu0 0.0
  %440 = vmatprep.subr.mxu0 0.0
  %441 = vmatpush1.msra.mxu0 0.0
  %442 = vmatprep.mubr.f32.mxu0 0.0
  %443 = vmatmul.mubr.f32.gmra.mrb[0].mxu0 %v376
  %v444 = vpop.f32.mrb[0].mxu0
  %v445 = vadd.f32 0.0, %v444
  %v446 = vpop.f32.mrb[0].mxu0
  %447 = vdwg.mxu0
  %v448 = vadd.f32 %v299, %v301
  %v449 = vadd.f32 %v295, %v297
  %v451 = vsel %vm62, %v448, 0
  %453 = vmatprep.subr.mxu0 0.0
  %454 = vmatpush1.msra.mxu0 %v449
  %455 = vmatprep.subr.mxu0 0.0
  %456 = vmatpush1.msra.mxu0 0.0
  %457 = vmatprep.subr.mxu0 0.0
  %458 = vmatpush1.msra.mxu0 0.0
  %459 = vmatprep.subr.mxu0 0.0
  %460 = vmatpush1.msra.mxu0 0.0
  %461 = vmatprep.subr.mxu0 0.0
  %462 = vmatpush1.msra.mxu0 0.0
  %463 = vmatprep.subr.mxu0 0.0
  %464 = vmatpush1.msra.mxu0 0.0
  %465 = vmatprep.subr.mxu0 0.0
  %466 = vmatpush1.msra.mxu0 0.0
  %467 = vmatprep.subr.mxu0 0.0
  %468 = vmatpush1.msra.mxu0 0.0
  %469 = vmatprep.subr.mxu0 0.0
  %470 = vmatpush1.msra.mxu0 0.0
  %471 = vmatprep.subr.mxu0 0.0
  %472 = vmatpush1.msra.mxu0 0.0
  %473 = vmatprep.subr.mxu0 0.0
  %474 = vmatpush1.msra.mxu0 0.0
  %475 = vmatprep.subr.mxu0 0.0
  %476 = vmatpush1.msra.mxu0 0.0
  %477 = vmatprep.subr.mxu0 0.0
  %478 = vmatpush1.msra.mxu0 0.0
  %479 = vmatprep.subr.mxu0 0.0
  %480 = vmatpush1.msra.mxu0 0.0
  %481 = vmatprep.subr.mxu0 0.0
  %482 = vmatpush1.msra.mxu0 0.0
  %483 = vmatprep.subr.mxu0 0.0
  %484 = vmatpush1.msra.mxu0 0.0
  %485 = vmatprep.subr.mxu0 0.0
  %486 = vmatpush1.msra.mxu0 0.0
  %487 = vmatprep.subr.mxu0 0.0
  %488 = vmatpush1.msra.mxu0 0.0
  %489 = vmatprep.subr.mxu0 0.0
  %490 = vmatpush1.msra.mxu0 0.0
  %491 = vmatprep.subr.mxu0 0.0
  %492 = vmatpush1.msra.mxu0 0.0
  %493 = vmatprep.subr.mxu0 0.0
  %494 = vmatpush1.msra.mxu0 0.0
  %495 = vmatprep.subr.mxu0 0.0
  %496 = vmatpush1.msra.mxu0 0.0
  %497 = vmatprep.subr.mxu0 0.0
  %498 = vmatpush1.msra.mxu0 0.0
  %499 = vmatprep.subr.mxu0 0.0
  %500 = vmatpush1.msra.mxu0 0.0
  %501 = vmatprep.subr.mxu0 0.0
  %502 = vmatpush1.msra.mxu0 0.0
  %503 = vmatprep.subr.mxu0 0.0
  %504 = vmatpush1.msra.mxu0 0.0
  %505 = vmatprep.subr.mxu0 0.0
  %506 = vmatpush1.msra.mxu0 0.0
  %507 = vmatprep.subr.mxu0 0.0
  %508 = vmatpush1.msra.mxu0 0.0
  %509 = vmatprep.subr.mxu0 0.0
  %510 = vmatpush1.msra.mxu0 0.0
  %511 = vmatprep.subr.mxu0 0.0
  %512 = vmatpush1.msra.mxu0 0.0
  %513 = vmatprep.subr.mxu0 0.0
  %514 = vmatpush1.msra.mxu0 0.0
  %515 = vmatprep.subr.mxu0 0.0
  %516 = vmatpush1.msra.mxu0 0.0
  %517 = vmatprep.mubr.f32.mxu0 0.0
  %518 = vmatmul.mubr.f32.gmra.mrb[0].mxu0 %v451
  %v519 = vpop.f32.mrb[0].mxu0
  %v520 = vadd.f32 0.0, %v519
  %v521 = vpop.f32.mrb[0].mxu0
  %522 = vdwg.mxu0
  %v523 = vsub.f32 %v372, %v445
  %v524 = vsub.f32 %v520, %v372
  %v525 = vsub.f32 %v524, %v445
  %s526 = scalar_lea.vmem %s0, 32
  %v527 = vld [vmem:[%s526] sm:$0xff]
  %s528 = scalar_lea.vmem %s1, 32
  %v529 = vld [vmem:[%s528] sm:$0xff]
  %531 = vrot.lane.b32.xlu0 %v295, 120
  %v532 = vpop.permute.xlu0 %531
  %v535 = vsel %vm62, %v527, 0
  %537 = vmatprep.subr.mxu0 0.0
  %538 = vmatpush1.msra.mxu0 %v532
  %539 = vmatprep.subr.mxu0 0.0
  %540 = vmatpush1.msra.mxu0 0.0
  %541 = vmatprep.subr.mxu0 0.0
  %542 = vmatpush1.msra.mxu0 0.0
  %543 = vmatprep.subr.mxu0 0.0
  %544 = vmatpush1.msra.mxu0 0.0
  %545 = vmatprep.subr.mxu0 0.0
  %546 = vmatpush1.msra.mxu0 0.0
  %547 = vmatprep.subr.mxu0 0.0
  %548 = vmatpush1.msra.mxu0 0.0
  %549 = vmatprep.subr.mxu0 0.0
  %550 = vmatpush1.msra.mxu0 0.0
  %551 = vmatprep.subr.mxu0 0.0
  %552 = vmatpush1.msra.mxu0 0.0
  %553 = vmatprep.subr.mxu0 0.0
  %554 = vmatpush1.msra.mxu0 0.0
  %555 = vmatprep.subr.mxu0 0.0
  %556 = vmatpush1.msra.mxu0 0.0
  %557 = vmatprep.subr.mxu0 0.0
  %558 = vmatpush1.msra.mxu0 0.0
  %559 = vmatprep.subr.mxu0 0.0
  %560 = vmatpush1.msra.mxu0 0.0
  %561 = vmatprep.subr.mxu0 0.0
  %562 = vmatpush1.msra.mxu0 0.0
  %563 = vmatprep.subr.mxu0 0.0
  %564 = vmatpush1.msra.mxu0 0.0
  %565 = vmatprep.subr.mxu0 0.0
  %566 = vmatpush1.msra.mxu0 0.0
  %567 = vmatprep.subr.mxu0 0.0
  %568 = vmatpush1.msra.mxu0 0.0
  %569 = vmatprep.subr.mxu0 0.0
  %570 = vmatpush1.msra.mxu0 0.0
  %571 = vmatprep.subr.mxu0 0.0
  %572 = vmatpush1.msra.mxu0 0.0
  %573 = vmatprep.subr.mxu0 0.0
  %574 = vmatpush1.msra.mxu0 0.0
  %575 = vmatprep.subr.mxu0 0.0
  %576 = vmatpush1.msra.mxu0 0.0
  %577 = vmatprep.subr.mxu0 0.0
  %578 = vmatpush1.msra.mxu0 0.0
  %579 = vmatprep.subr.mxu0 0.0
  %580 = vmatpush1.msra.mxu0 0.0
  %581 = vmatprep.subr.mxu0 0.0
  %582 = vmatpush1.msra.mxu0 0.0
  %583 = vmatprep.subr.mxu0 0.0
  %584 = vmatpush1.msra.mxu0 0.0
  %585 = vmatprep.subr.mxu0 0.0
  %586 = vmatpush1.msra.mxu0 0.0
  %587 = vmatprep.subr.mxu0 0.0
  %588 = vmatpush1.msra.mxu0 0.0
  %589 = vmatprep.subr.mxu0 0.0
  %590 = vmatpush1.msra.mxu0 0.0
  %591 = vmatprep.subr.mxu0 0.0
  %592 = vmatpush1.msra.mxu0 0.0
  %593 = vmatprep.subr.mxu0 0.0
  %594 = vmatpush1.msra.mxu0 0.0
  %595 = vmatprep.subr.mxu0 0.0
  %596 = vmatpush1.msra.mxu0 0.0
  %597 = vmatprep.subr.mxu0 0.0
  %598 = vmatpush1.msra.mxu0 0.0
  %599 = vmatprep.subr.mxu0 0.0
  %600 = vmatpush1.msra.mxu0 0.0
  %601 = vmatprep.mubr.f32.mxu0 0.0
  %602 = vmatmul.mubr.f32.gmra.mrb[0].mxu0 %v535
  %v603 = vpop.f32.mrb[0].mxu0
  %v604 = vadd.f32 0.0, %v603
  %v605 = vpop.f32.mrb[0].mxu0
  %606 = vdwg.mxu0
  %608 = vrot.lane.b32.xlu0 %v297, 120
  %v609 = vpop.permute.xlu0 %608
  %v612 = vsel %vm62, %v529, 0
  %614 = vmatprep.subr.mxu0 0.0
  %615 = vmatpush1.msra.mxu0 %v609
  %616 = vmatprep.subr.mxu0 0.0
  %617 = vmatpush1.msra.mxu0 0.0
  %618 = vmatprep.subr.mxu0 0.0
  %619 = vmatpush1.msra.mxu0 0.0
  %620 = vmatprep.subr.mxu0 0.0
  %621 = vmatpush1.msra.mxu0 0.0
  %622 = vmatprep.subr.mxu0 0.0
  %623 = vmatpush1.msra.mxu0 0.0
  %624 = vmatprep.subr.mxu0 0.0
  %625 = vmatpush1.msra.mxu0 0.0
  %626 = vmatprep.subr.mxu0 0.0
  %627 = vmatpush1.msra.mxu0 0.0
  %628 = vmatprep.subr.mxu0 0.0
  %629 = vmatpush1.msra.mxu0 0.0
  %630 = vmatprep.subr.mxu0 0.0
  %631 = vmatpush1.msra.mxu0 0.0
  %632 = vmatprep.subr.mxu0 0.0
  %633 = vmatpush1.msra.mxu0 0.0
  %634 = vmatprep.subr.mxu0 0.0
  %635 = vmatpush1.msra.mxu0 0.0
  %636 = vmatprep.subr.mxu0 0.0
  %637 = vmatpush1.msra.mxu0 0.0
  %638 = vmatprep.subr.mxu0 0.0
  %639 = vmatpush1.msra.mxu0 0.0
  %640 = vmatprep.subr.mxu0 0.0
  %641 = vmatpush1.msra.mxu0 0.0
  %642 = vmatprep.subr.mxu0 0.0
  %643 = vmatpush1.msra.mxu0 0.0
  %644 = vmatprep.subr.mxu0 0.0
  %645 = vmatpush1.msra.mxu0 0.0
  %646 = vmatprep.subr.mxu0 0.0
  %647 = vmatpush1.msra.mxu0 0.0
  %648 = vmatprep.subr.mxu0 0.0
  %649 = vmatpush1.msra.mxu0 0.0
  %650 = vmatprep.subr.mxu0 0.0
  %651 = vmatpush1.msra.mxu0 0.0
  %652 = vmatprep.subr.mxu0 0.0
  %653 = vmatpush1.msra.mxu0 0.0
  %654 = vmatprep.subr.mxu0 0.0
  %655 = vmatpush1.msra.mxu0 0.0
  %656 = vmatprep.subr.mxu0 0.0
  %657 = vmatpush1.msra.mxu0 0.0
  %658 = vmatprep.subr.mxu0 0.0
  %659 = vmatpush1.msra.mxu0 0.0
  %660 = vmatprep.subr.mxu0 0.0
  %661 = vmatpush1.msra.mxu0 0.0
  %662 = vmatprep.subr.mxu0 0.0
  %663 = vmatpush1.msra.mxu0 0.0
  %664 = vmatprep.subr.mxu0 0.0
  %665 = vmatpush1.msra.mxu0 0.0
  %666 = vmatprep.subr.mxu0 0.0
  %667 = vmatpush1.msra.mxu0 0.0
  %668 = vmatprep.subr.mxu0 0.0
  %669 = vmatpush1.msra.mxu0 0.0
  %670 = vmatprep.subr.mxu0 0.0
  %671 = vmatpush1.msra.mxu0 0.0
  %672 = vmatprep.subr.mxu0 0.0
  %673 = vmatpush1.msra.mxu0 0.0
  %674 = vmatprep.subr.mxu0 0.0
  %675 = vmatpush1.msra.mxu0 0.0
  %676 = vmatprep.subr.mxu0 0.0
  %677 = vmatpush1.msra.mxu0 0.0
  %678 = vmatprep.mubr.f32.mxu0 0.0
  %679 = vmatmul.mubr.f32.gmra.mrb[0].mxu0 %v612
  %v680 = vpop.f32.mrb[0].mxu0
  %v681 = vadd.f32 0.0, %v680
  %v682 = vpop.f32.mrb[0].mxu0
  %683 = vdwg.mxu0
  %v684 = vadd.f32 %v527, %v529
  %686 = vrot.lane.b32.xlu0 %v449, 120
  %v687 = vpop.permute.xlu0 %686
  %v690 = vsel %vm62, %v684, 0
  %692 = vmatprep.subr.mxu0 0.0
  %693 = vmatpush1.msra.mxu0 %v687
  %694 = vmatprep.subr.mxu0 0.0
  %695 = vmatpush1.msra.mxu0 0.0
  %696 = vmatprep.subr.mxu0 0.0
  %697 = vmatpush1.msra.mxu0 0.0
  %698 = vmatprep.subr.mxu0 0.0
  %699 = vmatpush1.msra.mxu0 0.0
  %700 = vmatprep.subr.mxu0 0.0
  %701 = vmatpush1.msra.mxu0 0.0
  %702 = vmatprep.subr.mxu0 0.0
  %703 = vmatpush1.msra.mxu0 0.0
  %704 = vmatprep.subr.mxu0 0.0
  %705 = vmatpush1.msra.mxu0 0.0
  %706 = vmatprep.subr.mxu0 0.0
  %707 = vmatpush1.msra.mxu0 0.0
  %708 = vmatprep.subr.mxu0 0.0
  %709 = vmatpush1.msra.mxu0 0.0
  %710 = vmatprep.subr.mxu0 0.0
  %711 = vmatpush1.msra.mxu0 0.0
  %712 = vmatprep.subr.mxu0 0.0
  %713 = vmatpush1.msra.mxu0 0.0
  %714 = vmatprep.subr.mxu0 0.0
  %715 = vmatpush1.msra.mxu0 0.0
  %716 = vmatprep.subr.mxu0 0.0
  %717 = vmatpush1.msra.mxu0 0.0
  %718 = vmatprep.subr.mxu0 0.0
  %719 = vmatpush1.msra.mxu0 0.0
  %720 = vmatprep.subr.mxu0 0.0
  %721 = vmatpush1.msra.mxu0 0.0
  %722 = vmatprep.subr.mxu0 0.0
  %723 = vmatpush1.msra.mxu0 0.0
  %724 = vmatprep.subr.mxu0 0.0
  %725 = vmatpush1.msra.mxu0 0.0
  %726 = vmatprep.subr.mxu0 0.0
  %727 = vmatpush1.msra.mxu0 0.0
  %728 = vmatprep.subr.mxu0 0.0
  %729 = vmatpush1.msra.mxu0 0.0
  %730 = vmatprep.subr.mxu0 0.0
  %731 = vmatpush1.msra.mxu0 0.0
  %732 = vmatprep.subr.mxu0 0.0
  %733 = vmatpush1.msra.mxu0 0.0
  %734 = vmatprep.subr.mxu0 0.0
  %735 = vmatpush1.msra.mxu0 0.0
  %736 = vmatprep.subr.mxu0 0.0
  %737 = vmatpush1.msra.mxu0 0.0
  %738 = vmatprep.subr.mxu0 0.0
  %739 = vmatpush1.msra.mxu0 0.0
  %740 = vmatprep.subr.mxu0 0.0
  %741 = vmatpush1.msra.mxu0 0.0
  %742 = vmatprep.subr.mxu0 0.0
  %743 = vmatpush1.msra.mxu0 0.0
  %744 = vmatprep.subr.mxu0 0.0
  %745 = vmatpush1.msra.mxu0 0.0
  %746 = vmatprep.subr.mxu0 0.0
  %747 = vmatpush1.msra.mxu0 0.0
  %748 = vmatprep.subr.mxu0 0.0
  %749 = vmatpush1.msra.mxu0 0.0
  %750 = vmatprep.subr.mxu0 0.0
  %751 = vmatpush1.msra.mxu0 0.0
  %752 = vmatprep.subr.mxu0 0.0
  %753 = vmatpush1.msra.mxu0 0.0
  %754 = vmatprep.subr.mxu0 0.0
  %755 = vmatpush1.msra.mxu0 0.0
  %756 = vmatprep.mubr.f32.mxu0 0.0
  %757 = vmatmul.mubr.f32.gmra.mrb[0].mxu0 %v690
  %v758 = vpop.f32.mrb[0].mxu0
  %v759 = vadd.f32 0.0, %v758
  %v760 = vpop.f32.mrb[0].mxu0
  %761 = vdwg.mxu0
  %v762 = vsub.f32 %v604, %v681
  %v763 = vsub.f32 %v759, %v604
  %v764 = vsub.f32 %v763, %v681
  %766 = vrot.lane.b32.xlu0 %v762, 8
  %v767 = vpop.permute.xlu0 %766
  %v769 = vsel %vm62, %v523, %v767
  %771 = vrot.lane.b32.xlu0 %v764, 8
  %v772 = vpop.permute.xlu0 %771
  %v774 = vsel %vm62, %v525, %v772
  %s775 = scalar_lea.vmem %s6, 8
  %v776 = vld [vmem:[%s775] sm:$0xff]
  %s777 = scalar_lea.vmem %s7, 8
  %v778 = vld [vmem:[%s777] sm:$0xff]
  %v780 = vsel %vm62, %v776, 0
  %782 = vmatprep.subr.mxu0 0.0
  %783 = vmatpush1.msra.mxu0 %v769
  %784 = vmatprep.subr.mxu0 0.0
  %785 = vmatpush1.msra.mxu0 0.0
  %786 = vmatprep.subr.mxu0 0.0
  %787 = vmatpush1.msra.mxu0 0.0
  %788 = vmatprep.subr.mxu0 0.0
  %789 = vmatpush1.msra.mxu0 0.0
  %790 = vmatprep.subr.mxu0 0.0
  %791 = vmatpush1.msra.mxu0 0.0
  %792 = vmatprep.subr.mxu0 0.0
  %793 = vmatpush1.msra.mxu0 0.0
  %794 = vmatprep.subr.mxu0 0.0
  %795 = vmatpush1.msra.mxu0 0.0
  %796 = vmatprep.subr.mxu0 0.0
  %797 = vmatpush1.msra.mxu0 0.0
  %798 = vmatprep.subr.mxu0 0.0
  %799 = vmatpush1.msra.mxu0 0.0
  %800 = vmatprep.subr.mxu0 0.0
  %801 = vmatpush1.msra.mxu0 0.0
  %802 = vmatprep.subr.mxu0 0.0
  %803 = vmatpush1.msra.mxu0 0.0
  %804 = vmatprep.subr.mxu0 0.0
  %805 = vmatpush1.msra.mxu0 0.0
  %806 = vmatprep.subr.mxu0 0.0
  %807 = vmatpush1.msra.mxu0 0.0
  %808 = vmatprep.subr.mxu0 0.0
  %809 = vmatpush1.msra.mxu0 0.0
  %810 = vmatprep.subr.mxu0 0.0
  %811 = vmatpush1.msra.mxu0 0.0
  %812 = vmatprep.subr.mxu0 0.0
  %813 = vmatpush1.msra.mxu0 0.0
  %814 = vmatprep.subr.mxu0 0.0
  %815 = vmatpush1.msra.mxu0 0.0
  %816 = vmatprep.subr.mxu0 0.0
  %817 = vmatpush1.msra.mxu0 0.0
  %818 = vmatprep.subr.mxu0 0.0
  %819 = vmatpush1.msra.mxu0 0.0
  %820 = vmatprep.subr.mxu0 0.0
  %821 = vmatpush1.msra.mxu0 0.0
  %822 = vmatprep.subr.mxu0 0.0
  %823 = vmatpush1.msra.mxu0 0.0
  %824 = vmatprep.subr.mxu0 0.0
  %825 = vmatpush1.msra.mxu0 0.0
  %826 = vmatprep.subr.mxu0 0.0
  %827 = vmatpush1.msra.mxu0 0.0
  %828 = vmatprep.subr.mxu0 0.0
  %829 = vmatpush1.msra.mxu0 0.0
  %830 = vmatprep.subr.mxu0 0.0
  %831 = vmatpush1.msra.mxu0 0.0
  %832 = vmatprep.subr.mxu0 0.0
  %833 = vmatpush1.msra.mxu0 0.0
  %834 = vmatprep.subr.mxu0 0.0
  %835 = vmatpush1.msra.mxu0 0.0
  %836 = vmatprep.subr.mxu0 0.0
  %837 = vmatpush1.msra.mxu0 0.0
  %838 = vmatprep.subr.mxu0 0.0
  %839 = vmatpush1.msra.mxu0 0.0
  %840 = vmatprep.subr.mxu0 0.0
  %841 = vmatpush1.msra.mxu0 0.0
  %842 = vmatprep.subr.mxu0 0.0
  %843 = vmatpush1.msra.mxu0 0.0
  %844 = vmatprep.subr.mxu0 0.0
  %845 = vmatpush1.msra.mxu0 0.0
  %846 = vmatprep.mubr.f32.mxu0 0.0
  %847 = vmatmul.mubr.f32.gmra.mrb[0].mxu0 %v780
  %v848 = vpop.f32.mrb[0].mxu0
  %v849 = vadd.f32 0.0, %v848
  %v850 = vpop.f32.mrb[0].mxu0
  %851 = vdwg.mxu0
  %v853 = vsel %vm62, %v778, 0
  %855 = vmatprep.subr.mxu0 0.0
  %856 = vmatpush1.msra.mxu0 %v774
  %857 = vmatprep.subr.mxu0 0.0
  %858 = vmatpush1.msra.mxu0 0.0
  %859 = vmatprep.subr.mxu0 0.0
  %860 = vmatpush1.msra.mxu0 0.0
  %861 = vmatprep.subr.mxu0 0.0
  %862 = vmatpush1.msra.mxu0 0.0
  %863 = vmatprep.subr.mxu0 0.0
  %864 = vmatpush1.msra.mxu0 0.0
  %865 = vmatprep.subr.mxu0 0.0
  %866 = vmatpush1.msra.mxu0 0.0
  %867 = vmatprep.subr.mxu0 0.0
  %868 = vmatpush1.msra.mxu0 0.0
  %869 = vmatprep.subr.mxu0 0.0
  %870 = vmatpush1.msra.mxu0 0.0
  %871 = vmatprep.subr.mxu0 0.0
  %872 = vmatpush1.msra.mxu0 0.0
  %873 = vmatprep.subr.mxu0 0.0
  %874 = vmatpush1.msra.mxu0 0.0
  %875 = vmatprep.subr.mxu0 0.0
  %876 = vmatpush1.msra.mxu0 0.0
  %877 = vmatprep.subr.mxu0 0.0
  %878 = vmatpush1.msra.mxu0 0.0
  %879 = vmatprep.subr.mxu0 0.0
  %880 = vmatpush1.msra.mxu0 0.0
  %881 = vmatprep.subr.mxu0 0.0
  %882 = vmatpush1.msra.mxu0 0.0
  %883 = vmatprep.subr.mxu0 0.0
  %884 = vmatpush1.msra.mxu0 0.0
  %885 = vmatprep.subr.mxu0 0.0
  %886 = vmatpush1.msra.mxu0 0.0
  %887 = vmatprep.subr.mxu0 0.0
  %888 = vmatpush1.msra.mxu0 0.0
  %889 = vmatprep.subr.mxu0 0.0
  %890 = vmatpush1.msra.mxu0 0.0
  %891 = vmatprep.subr.mxu0 0.0
  %892 = vmatpush1.msra.mxu0 0.0
  %893 = vmatprep.subr.mxu0 0.0
  %894 = vmatpush1.msra.mxu0 0.0
  %895 = vmatprep.subr.mxu0 0.0
  %896 = vmatpush1.msra.mxu0 0.0
  %897 = vmatprep.subr.mxu0 0.0
  %898 = vmatpush1.msra.mxu0 0.0
  %899 = vmatprep.subr.mxu0 0.0
  %900 = vmatpush1.msra.mxu0 0.0
  %901 = vmatprep.subr.mxu0 0.0
  %902 = vmatpush1.msra.mxu0 0.0
  %903 = vmatprep.subr.mxu0 0.0
  %904 = vmatpush1.msra.mxu0 0.0
  %905 = vmatprep.subr.mxu0 0.0
  %906 = vmatpush1.msra.mxu0 0.0
  %907 = vmatprep.subr.mxu0 0.0
  %908 = vmatpush1.msra.mxu0 0.0
  %909 = vmatprep.subr.mxu0 0.0
  %910 = vmatpush1.msra.mxu0 0.0
  %911 = vmatprep.subr.mxu0 0.0
  %912 = vmatpush1.msra.mxu0 0.0
  %913 = vmatprep.subr.mxu0 0.0
  %914 = vmatpush1.msra.mxu0 0.0
  %915 = vmatprep.subr.mxu0 0.0
  %916 = vmatpush1.msra.mxu0 0.0
  %917 = vmatprep.subr.mxu0 0.0
  %918 = vmatpush1.msra.mxu0 0.0
  %919 = vmatprep.mubr.f32.mxu0 0.0
  %920 = vmatmul.mubr.f32.gmra.mrb[0].mxu0 %v853
  %v921 = vpop.f32.mrb[0].mxu0
  %v922 = vadd.f32 0.0, %v921
  %v923 = vpop.f32.mrb[0].mxu0
  %924 = vdwg.mxu0
  %v925 = vadd.f32 %v776, %v778
  %v926 = vadd.f32 %v769, %v774
  %v928 = vsel %vm62, %v925, 0
  %930 = vmatprep.subr.mxu0 0.0
  %931 = vmatpush1.msra.mxu0 %v926
  %932 = vmatprep.subr.mxu0 0.0
  %933 = vmatpush1.msra.mxu0 0.0
  %934 = vmatprep.subr.mxu0 0.0
  %935 = vmatpush1.msra.mxu0 0.0
  %936 = vmatprep.subr.mxu0 0.0
  %937 = vmatpush1.msra.mxu0 0.0
  %938 = vmatprep.subr.mxu0 0.0
  %939 = vmatpush1.msra.mxu0 0.0
  %940 = vmatprep.subr.mxu0 0.0
  %941 = vmatpush1.msra.mxu0 0.0
  %942 = vmatprep.subr.mxu0 0.0
  %943 = vmatpush1.msra.mxu0 0.0
  %944 = vmatprep.subr.mxu0 0.0
  %945 = vmatpush1.msra.mxu0 0.0
  %946 = vmatprep.subr.mxu0 0.0
  %947 = vmatpush1.msra.mxu0 0.0
  %948 = vmatprep.subr.mxu0 0.0
  %949 = vmatpush1.msra.mxu0 0.0
  %950 = vmatprep.subr.mxu0 0.0
  %951 = vmatpush1.msra.mxu0 0.0
  %952 = vmatprep.subr.mxu0 0.0
  %953 = vmatpush1.msra.mxu0 0.0
  %954 = vmatprep.subr.mxu0 0.0
  %955 = vmatpush1.msra.mxu0 0.0
  %956 = vmatprep.subr.mxu0 0.0
  %957 = vmatpush1.msra.mxu0 0.0
  %958 = vmatprep.subr.mxu0 0.0
  %959 = vmatpush1.msra.mxu0 0.0
  %960 = vmatprep.subr.mxu0 0.0
  %961 = vmatpush1.msra.mxu0 0.0
  %962 = vmatprep.subr.mxu0 0.0
  %963 = vmatpush1.msra.mxu0 0.0
  %964 = vmatprep.subr.mxu0 0.0
  %965 = vmatpush1.msra.mxu0 0.0
  %966 = vmatprep.subr.mxu0 0.0
  %967 = vmatpush1.msra.mxu0 0.0
  %968 = vmatprep.subr.mxu0 0.0
  %969 = vmatpush1.msra.mxu0 0.0
  %970 = vmatprep.subr.mxu0 0.0
  %971 = vmatpush1.msra.mxu0 0.0
  %972 = vmatprep.subr.mxu0 0.0
  %973 = vmatpush1.msra.mxu0 0.0
  %974 = vmatprep.subr.mxu0 0.0
  %975 = vmatpush1.msra.mxu0 0.0
  %976 = vmatprep.subr.mxu0 0.0
  %977 = vmatpush1.msra.mxu0 0.0
  %978 = vmatprep.subr.mxu0 0.0
  %979 = vmatpush1.msra.mxu0 0.0
  %980 = vmatprep.subr.mxu0 0.0
  %981 = vmatpush1.msra.mxu0 0.0
  %982 = vmatprep.subr.mxu0 0.0
  %983 = vmatpush1.msra.mxu0 0.0
  %984 = vmatprep.subr.mxu0 0.0
  %985 = vmatpush1.msra.mxu0 0.0
  %986 = vmatprep.subr.mxu0 0.0
  %987 = vmatpush1.msra.mxu0 0.0
  %988 = vmatprep.subr.mxu0 0.0
  %989 = vmatpush1.msra.mxu0 0.0
  %990 = vmatprep.subr.mxu0 0.0
  %991 = vmatpush1.msra.mxu0 0.0
  %992 = vmatprep.subr.mxu0 0.0
  %993 = vmatpush1.msra.mxu0 0.0
  %994 = vmatprep.mubr.f32.mxu0 0.0
  %995 = vmatmul.mubr.f32.gmra.mrb[0].mxu0 %v928
  %v996 = vpop.f32.mrb[0].mxu0
  %v997 = vadd.f32 0.0, %v996
  %v998 = vpop.f32.mrb[0].mxu0
  %999 = vdwg.mxu0
  %v1000 = vsub.f32 %v849, %v922
  %v1001 = vsub.f32 %v997, %v849
  %v1002 = vsub.f32 %v1001, %v922
  %s1003 = scalar_lea.vmem %s0, 16
  %v1004 = vld [vmem:[%s1003] sm:$0xff]
  %s1005 = scalar_lea.vmem %s1, 16
  %v1006 = vld [vmem:[%s1005] sm:$0xff]
  %v1008 = vsel %vm62, %v1004, 0
  %1010 = vmatprep.subr.mxu0 0.0
  %1011 = vmatpush1.msra.mxu0 %v1000
  %1012 = vmatprep.subr.mxu0 0.0
  %1013 = vmatpush1.msra.mxu0 0.0
  %1014 = vmatprep.subr.mxu0 0.0
  %1015 = vmatpush1.msra.mxu0 0.0
  %1016 = vmatprep.subr.mxu0 0.0
  %1017 = vmatpush1.msra.mxu0 0.0
  %1018 = vmatprep.subr.mxu0 0.0
  %1019 = vmatpush1.msra.mxu0 0.0
  %1020 = vmatprep.subr.mxu0 0.0
  %1021 = vmatpush1.msra.mxu0 0.0
  %1022 = vmatprep.subr.mxu0 0.0
  %1023 = vmatpush1.msra.mxu0 0.0
  %1024 = vmatprep.subr.mxu0 0.0
  %1025 = vmatpush1.msra.mxu0 0.0
  %1026 = vmatprep.subr.mxu0 0.0
  %1027 = vmatpush1.msra.mxu0 0.0
  %1028 = vmatprep.subr.mxu0 0.0
  %1029 = vmatpush1.msra.mxu0 0.0
  %1030 = vmatprep.subr.mxu0 0.0
  %1031 = vmatpush1.msra.mxu0 0.0
  %1032 = vmatprep.subr.mxu0 0.0
  %1033 = vmatpush1.msra.mxu0 0.0
  %1034 = vmatprep.subr.mxu0 0.0
  %1035 = vmatpush1.msra.mxu0 0.0
  %1036 = vmatprep.subr.mxu0 0.0
  %1037 = vmatpush1.msra.mxu0 0.0
  %1038 = vmatprep.subr.mxu0 0.0
  %1039 = vmatpush1.msra.mxu0 0.0
  %1040 = vmatprep.subr.mxu0 0.0
  %1041 = vmatpush1.msra.mxu0 0.0
  %1042 = vmatprep.subr.mxu0 0.0
  %1043 = vmatpush1.msra.mxu0 0.0
  %1044 = vmatprep.subr.mxu0 0.0
  %1045 = vmatpush1.msra.mxu0 0.0
  %1046 = vmatprep.subr.mxu0 0.0
  %1047 = vmatpush1.msra.mxu0 0.0
  %1048 = vmatprep.subr.mxu0 0.0
  %1049 = vmatpush1.msra.mxu0 0.0
  %1050 = vmatprep.subr.mxu0 0.0
  %1051 = vmatpush1.msra.mxu0 0.0
  %1052 = vmatprep.subr.mxu0 0.0
  %1053 = vmatpush1.msra.mxu0 0.0
  %1054 = vmatprep.subr.mxu0 0.0
  %1055 = vmatpush1.msra.mxu0 0.0
  %1056 = vmatprep.subr.mxu0 0.0
  %1057 = vmatpush1.msra.mxu0 0.0
  %1058 = vmatprep.subr.mxu0 0.0
  %1059 = vmatpush1.msra.mxu0 0.0
  %1060 = vmatprep.subr.mxu0 0.0
  %1061 = vmatpush1.msra.mxu0 0.0
  %1062 = vmatprep.subr.mxu0 0.0
  %1063 = vmatpush1.msra.mxu0 0.0
  %1064 = vmatprep.subr.mxu0 0.0
  %1065 = vmatpush1.msra.mxu0 0.0
  %1066 = vmatprep.subr.mxu0 0.0
  %1067 = vmatpush1.msra.mxu0 0.0
  %1068 = vmatprep.subr.mxu0 0.0
  %1069 = vmatpush1.msra.mxu0 0.0
  %1070 = vmatprep.subr.mxu0 0.0
  %1071 = vmatpush1.msra.mxu0 0.0
  %1072 = vmatprep.subr.mxu0 0.0
  %1073 = vmatpush1.msra.mxu0 0.0
  %1074 = vmatprep.mubr.f32.mxu0 0.0
  %1075 = vmatmul.mubr.f32.gmra.mrb[0].mxu0 %v1008
  %v1076 = vpop.f32.mrb[0].mxu0
  %v1077 = vadd.f32 0.0, %v1076
  %v1078 = vpop.f32.mrb[0].mxu0
  %1079 = vdwg.mxu0
  %v1081 = vsel %vm62, %v1006, 0
  %1083 = vmatprep.subr.mxu0 0.0
  %1084 = vmatpush1.msra.mxu0 %v1002
  %1085 = vmatprep.subr.mxu0 0.0
  %1086 = vmatpush1.msra.mxu0 0.0
  %1087 = vmatprep.subr.mxu0 0.0
  %1088 = vmatpush1.msra.mxu0 0.0
  %1089 = vmatprep.subr.mxu0 0.0
  %1090 = vmatpush1.msra.mxu0 0.0
  %1091 = vmatprep.subr.mxu0 0.0
  %1092 = vmatpush1.msra.mxu0 0.0
  %1093 = vmatprep.subr.mxu0 0.0
  %1094 = vmatpush1.msra.mxu0 0.0
  %1095 = vmatprep.subr.mxu0 0.0
  %1096 = vmatpush1.msra.mxu0 0.0
  %1097 = vmatprep.subr.mxu0 0.0
  %1098 = vmatpush1.msra.mxu0 0.0
  %1099 = vmatprep.subr.mxu0 0.0
  %1100 = vmatpush1.msra.mxu0 0.0
  %1101 = vmatprep.subr.mxu0 0.0
  %1102 = vmatpush1.msra.mxu0 0.0
  %1103 = vmatprep.subr.mxu0 0.0
  %1104 = vmatpush1.msra.mxu0 0.0
  %1105 = vmatprep.subr.mxu0 0.0
  %1106 = vmatpush1.msra.mxu0 0.0
  %1107 = vmatprep.subr.mxu0 0.0
  %1108 = vmatpush1.msra.mxu0 0.0
  %1109 = vmatprep.subr.mxu0 0.0
  %1110 = vmatpush1.msra.mxu0 0.0
  %1111 = vmatprep.subr.mxu0 0.0
  %1112 = vmatpush1.msra.mxu0 0.0
  %1113 = vmatprep.subr.mxu0 0.0
  %1114 = vmatpush1.msra.mxu0 0.0
  %1115 = vmatprep.subr.mxu0 0.0
  %1116 = vmatpush1.msra.mxu0 0.0
  %1117 = vmatprep.subr.mxu0 0.0
  %1118 = vmatpush1.msra.mxu0 0.0
  %1119 = vmatprep.subr.mxu0 0.0
  %1120 = vmatpush1.msra.mxu0 0.0
  %1121 = vmatprep.subr.mxu0 0.0
  %1122 = vmatpush1.msra.mxu0 0.0
  %1123 = vmatprep.subr.mxu0 0.0
  %1124 = vmatpush1.msra.mxu0 0.0
  %1125 = vmatprep.subr.mxu0 0.0
  %1126 = vmatpush1.msra.mxu0 0.0
  %1127 = vmatprep.subr.mxu0 0.0
  %1128 = vmatpush1.msra.mxu0 0.0
  %1129 = vmatprep.subr.mxu0 0.0
  %1130 = vmatpush1.msra.mxu0 0.0
  %1131 = vmatprep.subr.mxu0 0.0
  %1132 = vmatpush1.msra.mxu0 0.0
  %1133 = vmatprep.subr.mxu0 0.0
  %1134 = vmatpush1.msra.mxu0 0.0
  %1135 = vmatprep.subr.mxu0 0.0
  %1136 = vmatpush1.msra.mxu0 0.0
  %1137 = vmatprep.subr.mxu0 0.0
  %1138 = vmatpush1.msra.mxu0 0.0
  %1139 = vmatprep.subr.mxu0 0.0
  %1140 = vmatpush1.msra.mxu0 0.0
  %1141 = vmatprep.subr.mxu0 0.0
  %1142 = vmatpush1.msra.mxu0 0.0
  %1143 = vmatprep.subr.mxu0 0.0
  %1144 = vmatpush1.msra.mxu0 0.0
  %1145 = vmatprep.subr.mxu0 0.0
  %1146 = vmatpush1.msra.mxu0 0.0
  %1147 = vmatprep.mubr.f32.mxu0 0.0
  %1148 = vmatmul.mubr.f32.gmra.mrb[0].mxu0 %v1081
  %v1149 = vpop.f32.mrb[0].mxu0
  %v1150 = vadd.f32 0.0, %v1149
  %v1151 = vpop.f32.mrb[0].mxu0
  %1152 = vdwg.mxu0
  %v1153 = vadd.f32 %v1004, %v1006
  %v1154 = vadd.f32 %v1000, %v1002
  %v1156 = vsel %vm62, %v1153, 0
  %1158 = vmatprep.subr.mxu0 0.0
  %1159 = vmatpush1.msra.mxu0 %v1154
  %1160 = vmatprep.subr.mxu0 0.0
  %1161 = vmatpush1.msra.mxu0 0.0
  %1162 = vmatprep.subr.mxu0 0.0
  %1163 = vmatpush1.msra.mxu0 0.0
  %1164 = vmatprep.subr.mxu0 0.0
  %1165 = vmatpush1.msra.mxu0 0.0
  %1166 = vmatprep.subr.mxu0 0.0
  %1167 = vmatpush1.msra.mxu0 0.0
  %1168 = vmatprep.subr.mxu0 0.0
  %1169 = vmatpush1.msra.mxu0 0.0
  %1170 = vmatprep.subr.mxu0 0.0
  %1171 = vmatpush1.msra.mxu0 0.0
  %1172 = vmatprep.subr.mxu0 0.0
  %1173 = vmatpush1.msra.mxu0 0.0
  %1174 = vmatprep.subr.mxu0 0.0
  %1175 = vmatpush1.msra.mxu0 0.0
  %1176 = vmatprep.subr.mxu0 0.0
  %1177 = vmatpush1.msra.mxu0 0.0
  %1178 = vmatprep.subr.mxu0 0.0
  %1179 = vmatpush1.msra.mxu0 0.0
  %1180 = vmatprep.subr.mxu0 0.0
  %1181 = vmatpush1.msra.mxu0 0.0
  %1182 = vmatprep.subr.mxu0 0.0
  %1183 = vmatpush1.msra.mxu0 0.0
  %1184 = vmatprep.subr.mxu0 0.0
  %1185 = vmatpush1.msra.mxu0 0.0
  %1186 = vmatprep.subr.mxu0 0.0
  %1187 = vmatpush1.msra.mxu0 0.0
  %1188 = vmatprep.subr.mxu0 0.0
  %1189 = vmatpush1.msra.mxu0 0.0
  %1190 = vmatprep.subr.mxu0 0.0
  %1191 = vmatpush1.msra.mxu0 0.0
  %1192 = vmatprep.subr.mxu0 0.0
  %1193 = vmatpush1.msra.mxu0 0.0
  %1194 = vmatprep.subr.mxu0 0.0
  %1195 = vmatpush1.msra.mxu0 0.0
  %1196 = vmatprep.subr.mxu0 0.0
  %1197 = vmatpush1.msra.mxu0 0.0
  %1198 = vmatprep.subr.mxu0 0.0
  %1199 = vmatpush1.msra.mxu0 0.0
  %1200 = vmatprep.subr.mxu0 0.0
  %1201 = vmatpush1.msra.mxu0 0.0
  %1202 = vmatprep.subr.mxu0 0.0
  %1203 = vmatpush1.msra.mxu0 0.0
  %1204 = vmatprep.subr.mxu0 0.0
  %1205 = vmatpush1.msra.mxu0 0.0
  %1206 = vmatprep.subr.mxu0 0.0
  %1207 = vmatpush1.msra.mxu0 0.0
  %1208 = vmatprep.subr.mxu0 0.0
  %1209 = vmatpush1.msra.mxu0 0.0
  %1210 = vmatprep.subr.mxu0 0.0
  %1211 = vmatpush1.msra.mxu0 0.0
  %1212 = vmatprep.subr.mxu0 0.0
  %1213 = vmatpush1.msra.mxu0 0.0
  %1214 = vmatprep.subr.mxu0 0.0
  %1215 = vmatpush1.msra.mxu0 0.0
  %1216 = vmatprep.subr.mxu0 0.0
  %1217 = vmatpush1.msra.mxu0 0.0
  %1218 = vmatprep.subr.mxu0 0.0
  %1219 = vmatpush1.msra.mxu0 0.0
  %1220 = vmatprep.subr.mxu0 0.0
  %1221 = vmatpush1.msra.mxu0 0.0
  %1222 = vmatprep.mubr.f32.mxu0 0.0
  %1223 = vmatmul.mubr.f32.gmra.mrb[0].mxu0 %v1156
  %v1224 = vpop.f32.mrb[0].mxu0
  %v1225 = vadd.f32 0.0, %v1224
  %v1226 = vpop.f32.mrb[0].mxu0
  %1227 = vdwg.mxu0
  %v1228 = vsub.f32 %v1077, %v1150
  %v1229 = vsub.f32 %v1225, %v1077
  %v1230 = vsub.f32 %v1229, %v1150
  %s1231 = scalar_lea.vmem %s0, 40
  %v1232 = vld [vmem:[%s1231] sm:$0xff]
  %s1233 = scalar_lea.vmem %s1, 40
  %v1234 = vld [vmem:[%s1233] sm:$0xff]
  %1236 = vrot.lane.b32.xlu0 %v1000, 120
  %v1237 = vpop.permute.xlu0 %1236
  %v1240 = vsel %vm62, %v1232, 0
  %1242 = vmatprep.subr.mxu0 0.0
  %1243 = vmatpush1.msra.mxu0 %v1237
  %1244 = vmatprep.subr.mxu0 0.0
  %1245 = vmatpush1.msra.mxu0 0.0
  %1246 = vmatprep.subr.mxu0 0.0
  %1247 = vmatpush1.msra.mxu0 0.0
  %1248 = vmatprep.subr.mxu0 0.0
  %1249 = vmatpush1.msra.mxu0 0.0
  %1250 = vmatprep.subr.mxu0 0.0
  %1251 = vmatpush1.msra.mxu0 0.0
  %1252 = vmatprep.subr.mxu0 0.0
  %1253 = vmatpush1.msra.mxu0 0.0
  %1254 = vmatprep.subr.mxu0 0.0
  %1255 = vmatpush1.msra.mxu0 0.0
  %1256 = vmatprep.subr.mxu0 0.0
  %1257 = vmatpush1.msra.mxu0 0.0
  %1258 = vmatprep.subr.mxu0 0.0
  %1259 = vmatpush1.msra.mxu0 0.0
  %1260 = vmatprep.subr.mxu0 0.0
  %1261 = vmatpush1.msra.mxu0 0.0
  %1262 = vmatprep.subr.mxu0 0.0
  %1263 = vmatpush1.msra.mxu0 0.0
  %1264 = vmatprep.subr.mxu0 0.0
  %1265 = vmatpush1.msra.mxu0 0.0
  %1266 = vmatprep.subr.mxu0 0.0
  %1267 = vmatpush1.msra.mxu0 0.0
  %1268 = vmatprep.subr.mxu0 0.0
  %1269 = vmatpush1.msra.mxu0 0.0
  %1270 = vmatprep.subr.mxu0 0.0
  %1271 = vmatpush1.msra.mxu0 0.0
  %1272 = vmatprep.subr.mxu0 0.0
  %1273 = vmatpush1.msra.mxu0 0.0
  %1274 = vmatprep.subr.mxu0 0.0
  %1275 = vmatpush1.msra.mxu0 0.0
  %1276 = vmatprep.subr.mxu0 0.0
  %1277 = vmatpush1.msra.mxu0 0.0
  %1278 = vmatprep.subr.mxu0 0.0
  %1279 = vmatpush1.msra.mxu0 0.0
  %1280 = vmatprep.subr.mxu0 0.0
  %1281 = vmatpush1.msra.mxu0 0.0
  %1282 = vmatprep.subr.mxu0 0.0
  %1283 = vmatpush1.msra.mxu0 0.0
  %1284 = vmatprep.subr.mxu0 0.0
  %1285 = vmatpush1.msra.mxu0 0.0
  %1286 = vmatprep.subr.mxu0 0.0
  %1287 = vmatpush1.msra.mxu0 0.0
  %1288 = vmatprep.subr.mxu0 0.0
  %1289 = vmatpush1.msra.mxu0 0.0
  %1290 = vmatprep.subr.mxu0 0.0
  %1291 = vmatpush1.msra.mxu0 0.0
  %1292 = vmatprep.subr.mxu0 0.0
  %1293 = vmatpush1.msra.mxu0 0.0
  %1294 = vmatprep.subr.mxu0 0.0
  %1295 = vmatpush1.msra.mxu0 0.0
  %1296 = vmatprep.subr.mxu0 0.0
  %1297 = vmatpush1.msra.mxu0 0.0
  %1298 = vmatprep.subr.mxu0 0.0
  %1299 = vmatpush1.msra.mxu0 0.0
  %1300 = vmatprep.subr.mxu0 0.0
  %1301 = vmatpush1.msra.mxu0 0.0
  %1302 = vmatprep.subr.mxu0 0.0
  %1303 = vmatpush1.msra.mxu0 0.0
  %1304 = vmatprep.subr.mxu0 0.0
  %1305 = vmatpush1.msra.mxu0 0.0
  %1306 = vmatprep.mubr.f32.mxu0 0.0
  %1307 = vmatmul.mubr.f32.gmra.mrb[0].mxu0 %v1240
  %v1308 = vpop.f32.mrb[0].mxu0
  %v1309 = vadd.f32 0.0, %v1308
  %v1310 = vpop.f32.mrb[0].mxu0
  %1311 = vdwg.mxu0
  %1313 = vrot.lane.b32.xlu0 %v1002, 120
  %v1314 = vpop.permute.xlu0 %1313
  %v1317 = vsel %vm62, %v1234, 0
  %1319 = vmatprep.subr.mxu0 0.0
  %1320 = vmatpush1.msra.mxu0 %v1314
  %1321 = vmatprep.subr.mxu0 0.0
  %1322 = vmatpush1.msra.mxu0 0.0
  %1323 = vmatprep.subr.mxu0 0.0
  %1324 = vmatpush1.msra.mxu0 0.0
  %1325 = vmatprep.subr.mxu0 0.0
  %1326 = vmatpush1.msra.mxu0 0.0
  %1327 = vmatprep.subr.mxu0 0.0
  %1328 = vmatpush1.msra.mxu0 0.0
  %1329 = vmatprep.subr.mxu0 0.0
  %1330 = vmatpush1.msra.mxu0 0.0
  %1331 = vmatprep.subr.mxu0 0.0
  %1332 = vmatpush1.msra.mxu0 0.0
  %1333 = vmatprep.subr.mxu0 0.0
  %1334 = vmatpush1.msra.mxu0 0.0
  %1335 = vmatprep.subr.mxu0 0.0
  %1336 = vmatpush1.msra.mxu0 0.0
  %1337 = vmatprep.subr.mxu0 0.0
  %1338 = vmatpush1.msra.mxu0 0.0
  %1339 = vmatprep.subr.mxu0 0.0
  %1340 = vmatpush1.msra.mxu0 0.0
  %1341 = vmatprep.subr.mxu0 0.0
  %1342 = vmatpush1.msra.mxu0 0.0
  %1343 = vmatprep.subr.mxu0 0.0
  %1344 = vmatpush1.msra.mxu0 0.0
  %1345 = vmatprep.subr.mxu0 0.0
  %1346 = vmatpush1.msra.mxu0 0.0
  %1347 = vmatprep.subr.mxu0 0.0
  %1348 = vmatpush1.msra.mxu0 0.0
  %1349 = vmatprep.subr.mxu0 0.0
  %1350 = vmatpush1.msra.mxu0 0.0
  %1351 = vmatprep.subr.mxu0 0.0
  %1352 = vmatpush1.msra.mxu0 0.0
  %1353 = vmatprep.subr.mxu0 0.0
  %1354 = vmatpush1.msra.mxu0 0.0
  %1355 = vmatprep.subr.mxu0 0.0
  %1356 = vmatpush1.msra.mxu0 0.0
  %1357 = vmatprep.subr.mxu0 0.0
  %1358 = vmatpush1.msra.mxu0 0.0
  %1359 = vmatprep.subr.mxu0 0.0
  %1360 = vmatpush1.msra.mxu0 0.0
  %1361 = vmatprep.subr.mxu0 0.0
  %1362 = vmatpush1.msra.mxu0 0.0
  %1363 = vmatprep.subr.mxu0 0.0
  %1364 = vmatpush1.msra.mxu0 0.0
  %1365 = vmatprep.subr.mxu0 0.0
  %1366 = vmatpush1.msra.mxu0 0.0
  %1367 = vmatprep.subr.mxu0 0.0
  %1368 = vmatpush1.msra.mxu0 0.0
  %1369 = vmatprep.subr.mxu0 0.0
  %1370 = vmatpush1.msra.mxu0 0.0
  %1371 = vmatprep.subr.mxu0 0.0
  %1372 = vmatpush1.msra.mxu0 0.0
  %1373 = vmatprep.subr.mxu0 0.0
  %1374 = vmatpush1.msra.mxu0 0.0
  %1375 = vmatprep.subr.mxu0 0.0
  %1376 = vmatpush1.msra.mxu0 0.0
  %1377 = vmatprep.subr.mxu0 0.0
  %1378 = vmatpush1.msra.mxu0 0.0
  %1379 = vmatprep.subr.mxu0 0.0
  %1380 = vmatpush1.msra.mxu0 0.0
  %1381 = vmatprep.subr.mxu0 0.0
  %1382 = vmatpush1.msra.mxu0 0.0
  %1383 = vmatprep.mubr.f32.mxu0 0.0
  %1384 = vmatmul.mubr.f32.gmra.mrb[0].mxu0 %v1317
  %v1385 = vpop.f32.mrb[0].mxu0
  %v1386 = vadd.f32 0.0, %v1385
  %v1387 = vpop.f32.mrb[0].mxu0
  %1388 = vdwg.mxu0
  %v1389 = vadd.f32 %v1232, %v1234
  %1391 = vrot.lane.b32.xlu0 %v1154, 120
  %v1392 = vpop.permute.xlu0 %1391
  %v1395 = vsel %vm62, %v1389, 0
  %1397 = vmatprep.subr.mxu0 0.0
  %1398 = vmatpush1.msra.mxu0 %v1392
  %1399 = vmatprep.subr.mxu0 0.0
  %1400 = vmatpush1.msra.mxu0 0.0
  %1401 = vmatprep.subr.mxu0 0.0
  %1402 = vmatpush1.msra.mxu0 0.0
  %1403 = vmatprep.subr.mxu0 0.0
  %1404 = vmatpush1.msra.mxu0 0.0
  %1405 = vmatprep.subr.mxu0 0.0
  %1406 = vmatpush1.msra.mxu0 0.0
  %1407 = vmatprep.subr.mxu0 0.0
  %1408 = vmatpush1.msra.mxu0 0.0
  %1409 = vmatprep.subr.mxu0 0.0
  %1410 = vmatpush1.msra.mxu0 0.0
  %1411 = vmatprep.subr.mxu0 0.0
  %1412 = vmatpush1.msra.mxu0 0.0
  %1413 = vmatprep.subr.mxu0 0.0
  %1414 = vmatpush1.msra.mxu0 0.0
  %1415 = vmatprep.subr.mxu0 0.0
  %1416 = vmatpush1.msra.mxu0 0.0
  %1417 = vmatprep.subr.mxu0 0.0
  %1418 = vmatpush1.msra.mxu0 0.0
  %1419 = vmatprep.subr.mxu0 0.0
  %1420 = vmatpush1.msra.mxu0 0.0
  %1421 = vmatprep.subr.mxu0 0.0
  %1422 = vmatpush1.msra.mxu0 0.0
  %1423 = vmatprep.subr.mxu0 0.0
  %1424 = vmatpush1.msra.mxu0 0.0
  %1425 = vmatprep.subr.mxu0 0.0
  %1426 = vmatpush1.msra.mxu0 0.0
  %1427 = vmatprep.subr.mxu0 0.0
  %1428 = vmatpush1.msra.mxu0 0.0
  %1429 = vmatprep.subr.mxu0 0.0
  %1430 = vmatpush1.msra.mxu0 0.0
  %1431 = vmatprep.subr.mxu0 0.0
  %1432 = vmatpush1.msra.mxu0 0.0
  %1433 = vmatprep.subr.mxu0 0.0
  %1434 = vmatpush1.msra.mxu0 0.0
  %1435 = vmatprep.subr.mxu0 0.0
  %1436 = vmatpush1.msra.mxu0 0.0
  %1437 = vmatprep.subr.mxu0 0.0
  %1438 = vmatpush1.msra.mxu0 0.0
  %1439 = vmatprep.subr.mxu0 0.0
  %1440 = vmatpush1.msra.mxu0 0.0
  %1441 = vmatprep.subr.mxu0 0.0
  %1442 = vmatpush1.msra.mxu0 0.0
  %1443 = vmatprep.subr.mxu0 0.0
  %1444 = vmatpush1.msra.mxu0 0.0
  %1445 = vmatprep.subr.mxu0 0.0
  %1446 = vmatpush1.msra.mxu0 0.0
  %1447 = vmatprep.subr.mxu0 0.0
  %1448 = vmatpush1.msra.mxu0 0.0
  %1449 = vmatprep.subr.mxu0 0.0
  %1450 = vmatpush1.msra.mxu0 0.0
  %1451 = vmatprep.subr.mxu0 0.0
  %1452 = vmatpush1.msra.mxu0 0.0
  %1453 = vmatprep.subr.mxu0 0.0
  %1454 = vmatpush1.msra.mxu0 0.0
  %1455 = vmatprep.subr.mxu0 0.0
  %1456 = vmatpush1.msra.mxu0 0.0
  %1457 = vmatprep.subr.mxu0 0.0
  %1458 = vmatpush1.msra.mxu0 0.0
  %1459 = vmatprep.subr.mxu0 0.0
  %1460 = vmatpush1.msra.mxu0 0.0
  %1461 = vmatprep.mubr.f32.mxu0 0.0
  %1462 = vmatmul.mubr.f32.gmra.mrb[0].mxu0 %v1395
  %v1463 = vpop.f32.mrb[0].mxu0
  %v1464 = vadd.f32 0.0, %v1463
  %v1465 = vpop.f32.mrb[0].mxu0
  %1466 = vdwg.mxu0
  %v1467 = vsub.f32 %v1309, %v1386
  %v1468 = vsub.f32 %v1464, %v1309
  %v1469 = vsub.f32 %v1468, %v1386
  %1471 = vrot.lane.b32.xlu0 %v1467, 8
  %v1472 = vpop.permute.xlu0 %1471
  %v1474 = vsel %vm62, %v1228, %v1472
  %1476 = vrot.lane.b32.xlu0 %v1469, 8
  %v1477 = vpop.permute.xlu0 %1476
  %v1479 = vsel %vm62, %v1230, %v1477
  %s1480 = scalar_lea.vmem %s6, 16
  %v1481 = vld [vmem:[%s1480] sm:$0xff]
  %s1482 = scalar_lea.vmem %s7, 16
  %v1483 = vld [vmem:[%s1482] sm:$0xff]
  %v1485 = vsel %vm62, %v1481, 0
  %1487 = vmatprep.subr.mxu0 0.0
  %1488 = vmatpush1.msra.mxu0 %v1474
  %1489 = vmatprep.subr.mxu0 0.0
  %1490 = vmatpush1.msra.mxu0 0.0
  %1491 = vmatprep.subr.mxu0 0.0
  %1492 = vmatpush1.msra.mxu0 0.0
  %1493 = vmatprep.subr.mxu0 0.0
  %1494 = vmatpush1.msra.mxu0 0.0
  %1495 = vmatprep.subr.mxu0 0.0
  %1496 = vmatpush1.msra.mxu0 0.0
  %1497 = vmatprep.subr.mxu0 0.0
  %1498 = vmatpush1.msra.mxu0 0.0
  %1499 = vmatprep.subr.mxu0 0.0
  %1500 = vmatpush1.msra.mxu0 0.0
  %1501 = vmatprep.subr.mxu0 0.0
  %1502 = vmatpush1.msra.mxu0 0.0
  %1503 = vmatprep.subr.mxu0 0.0
  %1504 = vmatpush1.msra.mxu0 0.0
  %1505 = vmatprep.subr.mxu0 0.0
  %1506 = vmatpush1.msra.mxu0 0.0
  %1507 = vmatprep.subr.mxu0 0.0
  %1508 = vmatpush1.msra.mxu0 0.0
  %1509 = vmatprep.subr.mxu0 0.0
  %1510 = vmatpush1.msra.mxu0 0.0
  %1511 = vmatprep.subr.mxu0 0.0
  %1512 = vmatpush1.msra.mxu0 0.0
  %1513 = vmatprep.subr.mxu0 0.0
  %1514 = vmatpush1.msra.mxu0 0.0
  %1515 = vmatprep.subr.mxu0 0.0
  %1516 = vmatpush1.msra.mxu0 0.0
  %1517 = vmatprep.subr.mxu0 0.0
  %1518 = vmatpush1.msra.mxu0 0.0
  %1519 = vmatprep.subr.mxu0 0.0
  %1520 = vmatpush1.msra.mxu0 0.0
  %1521 = vmatprep.subr.mxu0 0.0
  %1522 = vmatpush1.msra.mxu0 0.0
  %1523 = vmatprep.subr.mxu0 0.0
  %1524 = vmatpush1.msra.mxu0 0.0
  %1525 = vmatprep.subr.mxu0 0.0
  %1526 = vmatpush1.msra.mxu0 0.0
  %1527 = vmatprep.subr.mxu0 0.0
  %1528 = vmatpush1.msra.mxu0 0.0
  %1529 = vmatprep.subr.mxu0 0.0
  %1530 = vmatpush1.msra.mxu0 0.0
  %1531 = vmatprep.subr.mxu0 0.0
  %1532 = vmatpush1.msra.mxu0 0.0
  %1533 = vmatprep.subr.mxu0 0.0
  %1534 = vmatpush1.msra.mxu0 0.0
  %1535 = vmatprep.subr.mxu0 0.0
  %1536 = vmatpush1.msra.mxu0 0.0
  %1537 = vmatprep.subr.mxu0 0.0
  %1538 = vmatpush1.msra.mxu0 0.0
  %1539 = vmatprep.subr.mxu0 0.0
  %1540 = vmatpush1.msra.mxu0 0.0
  %1541 = vmatprep.subr.mxu0 0.0
  %1542 = vmatpush1.msra.mxu0 0.0
  %1543 = vmatprep.subr.mxu0 0.0
  %1544 = vmatpush1.msra.mxu0 0.0
  %1545 = vmatprep.subr.mxu0 0.0
  %1546 = vmatpush1.msra.mxu0 0.0
  %1547 = vmatprep.subr.mxu0 0.0
  %1548 = vmatpush1.msra.mxu0 0.0
  %1549 = vmatprep.subr.mxu0 0.0
  %1550 = vmatpush1.msra.mxu0 0.0
  %1551 = vmatprep.mubr.f32.mxu0 0.0
  %1552 = vmatmul.mubr.f32.gmra.mrb[0].mxu0 %v1485
  %v1553 = vpop.f32.mrb[0].mxu0
  %v1554 = vadd.f32 0.0, %v1553
  %v1555 = vpop.f32.mrb[0].mxu0
  %1556 = vdwg.mxu0
  %v1558 = vsel %vm62, %v1483, 0
  %1560 = vmatprep.subr.mxu0 0.0
  %1561 = vmatpush1.msra.mxu0 %v1479
  %1562 = vmatprep.subr.mxu0 0.0
  %1563 = vmatpush1.msra.mxu0 0.0
  %1564 = vmatprep.subr.mxu0 0.0
  %1565 = vmatpush1.msra.mxu0 0.0
  %1566 = vmatprep.subr.mxu0 0.0
  %1567 = vmatpush1.msra.mxu0 0.0
  %1568 = vmatprep.subr.mxu0 0.0
  %1569 = vmatpush1.msra.mxu0 0.0
  %1570 = vmatprep.subr.mxu0 0.0
  %1571 = vmatpush1.msra.mxu0 0.0
  %1572 = vmatprep.subr.mxu0 0.0
  %1573 = vmatpush1.msra.mxu0 0.0
  %1574 = vmatprep.subr.mxu0 0.0
  %1575 = vmatpush1.msra.mxu0 0.0
  %1576 = vmatprep.subr.mxu0 0.0
  %1577 = vmatpush1.msra.mxu0 0.0
  %1578 = vmatprep.subr.mxu0 0.0
  %1579 = vmatpush1.msra.mxu0 0.0
  %1580 = vmatprep.subr.mxu0 0.0
  %1581 = vmatpush1.msra.mxu0 0.0
  %1582 = vmatprep.subr.mxu0 0.0
  %1583 = vmatpush1.msra.mxu0 0.0
  %1584 = vmatprep.subr.mxu0 0.0
  %1585 = vmatpush1.msra.mxu0 0.0
  %1586 = vmatprep.subr.mxu0 0.0
  %1587 = vmatpush1.msra.mxu0 0.0
  %1588 = vmatprep.subr.mxu0 0.0
  %1589 = vmatpush1.msra.mxu0 0.0
  %1590 = vmatprep.subr.mxu0 0.0
  %1591 = vmatpush1.msra.mxu0 0.0
  %1592 = vmatprep.subr.mxu0 0.0
  %1593 = vmatpush1.msra.mxu0 0.0
  %1594 = vmatprep.subr.mxu0 0.0
  %1595 = vmatpush1.msra.mxu0 0.0
  %1596 = vmatprep.subr.mxu0 0.0
  %1597 = vmatpush1.msra.mxu0 0.0
  %1598 = vmatprep.subr.mxu0 0.0
  %1599 = vmatpush1.msra.mxu0 0.0
  %1600 = vmatprep.subr.mxu0 0.0
  %1601 = vmatpush1.msra.mxu0 0.0
  %1602 = vmatprep.subr.mxu0 0.0
  %1603 = vmatpush1.msra.mxu0 0.0
  %1604 = vmatprep.subr.mxu0 0.0
  %1605 = vmatpush1.msra.mxu0 0.0
  %1606 = vmatprep.subr.mxu0 0.0
  %1607 = vmatpush1.msra.mxu0 0.0
  %1608 = vmatprep.subr.mxu0 0.0
  %1609 = vmatpush1.msra.mxu0 0.0
  %1610 = vmatprep.subr.mxu0 0.0
  %1611 = vmatpush1.msra.mxu0 0.0
  %1612 = vmatprep.subr.mxu0 0.0
  %1613 = vmatpush1.msra.mxu0 0.0
  %1614 = vmatprep.subr.mxu0 0.0
  %1615 = vmatpush1.msra.mxu0 0.0
  %1616 = vmatprep.subr.mxu0 0.0
  %1617 = vmatpush1.msra.mxu0 0.0
  %1618 = vmatprep.subr.mxu0 0.0
  %1619 = vmatpush1.msra.mxu0 0.0
  %1620 = vmatprep.subr.mxu0 0.0
  %1621 = vmatpush1.msra.mxu0 0.0
  %1622 = vmatprep.subr.mxu0 0.0
  %1623 = vmatpush1.msra.mxu0 0.0
  %1624 = vmatprep.mubr.f32.mxu0 0.0
  %1625 = vmatmul.mubr.f32.gmra.mrb[0].mxu0 %v1558
  %v1626 = vpop.f32.mrb[0].mxu0
  %v1627 = vadd.f32 0.0, %v1626
  %v1628 = vpop.f32.mrb[0].mxu0
  %1629 = vdwg.mxu0
  %v1630 = vadd.f32 %v1481, %v1483
  %v1631 = vadd.f32 %v1474, %v1479
  %v1633 = vsel %vm62, %v1630, 0
  %1635 = vmatprep.subr.mxu0 0.0
  %1636 = vmatpush1.msra.mxu0 %v1631
  %1637 = vmatprep.subr.mxu0 0.0
  %1638 = vmatpush1.msra.mxu0 0.0
  %1639 = vmatprep.subr.mxu0 0.0
  %1640 = vmatpush1.msra.mxu0 0.0
  %1641 = vmatprep.subr.mxu0 0.0
  %1642 = vmatpush1.msra.mxu0 0.0
  %1643 = vmatprep.subr.mxu0 0.0
  %1644 = vmatpush1.msra.mxu0 0.0
  %1645 = vmatprep.subr.mxu0 0.0
  %1646 = vmatpush1.msra.mxu0 0.0
  %1647 = vmatprep.subr.mxu0 0.0
  %1648 = vmatpush1.msra.mxu0 0.0
  %1649 = vmatprep.subr.mxu0 0.0
  %1650 = vmatpush1.msra.mxu0 0.0
  %1651 = vmatprep.subr.mxu0 0.0
  %1652 = vmatpush1.msra.mxu0 0.0
  %1653 = vmatprep.subr.mxu0 0.0
  %1654 = vmatpush1.msra.mxu0 0.0
  %1655 = vmatprep.subr.mxu0 0.0
  %1656 = vmatpush1.msra.mxu0 0.0
  %1657 = vmatprep.subr.mxu0 0.0
  %1658 = vmatpush1.msra.mxu0 0.0
  %1659 = vmatprep.subr.mxu0 0.0
  %1660 = vmatpush1.msra.mxu0 0.0
  %1661 = vmatprep.subr.mxu0 0.0
  %1662 = vmatpush1.msra.mxu0 0.0
  %1663 = vmatprep.subr.mxu0 0.0
  %1664 = vmatpush1.msra.mxu0 0.0
  %1665 = vmatprep.subr.mxu0 0.0
  %1666 = vmatpush1.msra.mxu0 0.0
  %1667 = vmatprep.subr.mxu0 0.0
  %1668 = vmatpush1.msra.mxu0 0.0
  %1669 = vmatprep.subr.mxu0 0.0
  %1670 = vmatpush1.msra.mxu0 0.0
  %1671 = vmatprep.subr.mxu0 0.0
  %1672 = vmatpush1.msra.mxu0 0.0
  %1673 = vmatprep.subr.mxu0 0.0
  %1674 = vmatpush1.msra.mxu0 0.0
  %1675 = vmatprep.subr.mxu0 0.0
  %1676 = vmatpush1.msra.mxu0 0.0
  %1677 = vmatprep.subr.mxu0 0.0
  %1678 = vmatpush1.msra.mxu0 0.0
  %1679 = vmatprep.subr.mxu0 0.0
  %1680 = vmatpush1.msra.mxu0 0.0
  %1681 = vmatprep.subr.mxu0 0.0
  %1682 = vmatpush1.msra.mxu0 0.0
  %1683 = vmatprep.subr.mxu0 0.0
  %1684 = vmatpush1.msra.mxu0 0.0
  %1685 = vmatprep.subr.mxu0 0.0
  %1686 = vmatpush1.msra.mxu0 0.0
  %1687 = vmatprep.subr.mxu0 0.0
  %1688 = vmatpush1.msra.mxu0 0.0
  %1689 = vmatprep.subr.mxu0 0.0
  %1690 = vmatpush1.msra.mxu0 0.0
  %1691 = vmatprep.subr.mxu0 0.0
  %1692 = vmatpush1.msra.mxu0 0.0
  %1693 = vmatprep.subr.mxu0 0.0
  %1694 = vmatpush1.msra.mxu0 0.0
  %1695 = vmatprep.subr.mxu0 0.0
  %1696 = vmatpush1.msra.mxu0 0.0
  %1697 = vmatprep.subr.mxu0 0.0
  %1698 = vmatpush1.msra.mxu0 0.0
  %1699 = vmatprep.mubr.f32.mxu0 0.0
  %1700 = vmatmul.mubr.f32.gmra.mrb[0].mxu0 %v1633
  %v1701 = vpop.f32.mrb[0].mxu0
  %v1702 = vadd.f32 0.0, %v1701
  %v1703 = vpop.f32.mrb[0].mxu0
  %1704 = vdwg.mxu0
  %v1705 = vsub.f32 %v1554, %v1627
  %v1706 = vsub.f32 %v1702, %v1554
  %v1707 = vsub.f32 %v1706, %v1627
  %v1708 = vld [vmem:[%s2] sm:$0xff]
  %v1709 = vsub.f32 %v1708, %v1705
  %v1710 = vld [vmem:[%s3] sm:$0xff]
  %v1711 = vsub.f32 %v1710, %v1707
  %1713 = vrot.lane.b32.xlu0 %v1711, 8
  %v1714 = vpop.permute.xlu0 %1713
  %v1716 = vsel %vm62, %v1709, %v1714
  %v1718 = vrot.slane %v1716, 1
  %1719 = vrot.lane.b32.xlu0 %v1718, 16
  %v1720 = vpop.permute.xlu0 %1719
  %v1722 = vrot.slane %v1716, 2
  %1723 = vrot.lane.b32.xlu0 %v1722, 32
  %v1724 = vpop.permute.xlu0 %1723
  %v1726 = vrot.slane %v1716, 3
  %1727 = vrot.lane.b32.xlu0 %v1726, 48
  %v1728 = vpop.permute.xlu0 %1727
  %v1730 = vrot.slane %v1716, 4
  %1731 = vrot.lane.b32.xlu0 %v1730, 64
  %v1732 = vpop.permute.xlu0 %1731
  %v1734 = vrot.slane %v1716, 5
  %1735 = vrot.lane.b32.xlu0 %v1734, 80
  %v1736 = vpop.permute.xlu0 %1735
  %v1738 = vrot.slane %v1716, 6
  %1739 = vrot.lane.b32.xlu0 %v1738, 96
  %v1740 = vpop.permute.xlu0 %1739
  %v1742 = vrot.slane %v1716, 7
  %1743 = vrot.lane.b32.xlu0 %v1742, 112
  %v1744 = vpop.permute.xlu0 %1743
  %vm1746 = vcmask 130048
  %v1747 = vsel %vm1746, %v1716, %v1720
  %vm1748 = vcmask 261120
  %v1749 = vsel %vm1748, %v1747, %v1724
  %vm1750 = vcmask 392192
  %v1751 = vsel %vm1750, %v1749, %v1728
  %vm1752 = vcmask 523264
  %v1753 = vsel %vm1752, %v1751, %v1732
  %vm1754 = vcmask 654336
  %v1755 = vsel %vm1754, %v1753, %v1736
  %vm1756 = vcmask 785408
  %v1757 = vsel %vm1756, %v1755, %v1740
  %vm1758 = vcmask 916480
  %v1759 = vsel %vm1758, %v1757, %v1744
  %s1760 = scalar_lea.vmem %s2, 8
  %v1761 = vld [vmem:[%s1760] sm:$0xff]
  %1763 = vrot.lane.b32.xlu0 %v1705, 120
  %v1764 = vpop.permute.xlu0 %1763
  %v1766 = vsub.f32 %v1761, %v1764
  %s1767 = scalar_lea.vmem %s3, 8
  %v1768 = vld [vmem:[%s1767] sm:$0xff]
  %1770 = vrot.lane.b32.xlu0 %v1707, 120
  %v1771 = vpop.permute.xlu0 %1770
  %v1773 = vsub.f32 %v1768, %v1771
  %1775 = vrot.lane.b32.xlu0 %v1773, 8
  %v1776 = vpop.permute.xlu0 %1775
  %v1778 = vsel %vm62, %v1766, %v1776
  %v1780 = vrot.slane %v1778, 1
  %1781 = vrot.lane.b32.xlu0 %v1780, 16
  %v1782 = vpop.permute.xlu0 %1781
  %v1784 = vrot.slane %v1778, 2
  %1785 = vrot.lane.b32.xlu0 %v1784, 32
  %v1786 = vpop.permute.xlu0 %1785
  %v1788 = vrot.slane %v1778, 3
  %1789 = vrot.lane.b32.xlu0 %v1788, 48
  %v1790 = vpop.permute.xlu0 %1789
  %v1792 = vrot.slane %v1778, 4
  %1793 = vrot.lane.b32.xlu0 %v1792, 64
  %v1794 = vpop.permute.xlu0 %1793
  %v1796 = vrot.slane %v1778, 5
  %1797 = vrot.lane.b32.xlu0 %v1796, 80
  %v1798 = vpop.permute.xlu0 %1797
  %v1800 = vrot.slane %v1778, 6
  %1801 = vrot.lane.b32.xlu0 %v1800, 96
  %v1802 = vpop.permute.xlu0 %1801
  %v1804 = vrot.slane %v1778, 7
  %1805 = vrot.lane.b32.xlu0 %v1804, 112
  %v1806 = vpop.permute.xlu0 %1805
  %v1808 = vsel %vm1746, %v1778, %v1782
  %v1809 = vsel %vm1748, %v1808, %v1786
  %v1810 = vsel %vm1750, %v1809, %v1790
  %v1811 = vsel %vm1752, %v1810, %v1794
  %v1812 = vsel %vm1754, %v1811, %v1798
  %v1813 = vsel %vm1756, %v1812, %v1802
  %v1814 = vsel %vm1758, %v1813, %v1806
  %v1816 = vrot.slane %v1814, 7
  %vm1818 = vcmask 1040384
  %v1819 = vsel %vm1818, %v1759, %v1816
  %v1820 = vld [vmem:[%s4] sm:$0x3]
  %v1821 = vld [vmem:[%s5] sm:$0x3]
  %1823 = vrot.lane.b32.xlu0 %v1821, 4
  %v1824 = vpop.permute.xlu0 %1823
  %vm1826 = vcmask 31744
  %v1827 = vsel %vm1826, %v1820, %v1824
  %v1828 = vld [vmem:[%s8] sm:$0xff]
  %v1829 = vld [vmem:[%s9] sm:$0x1]
  %v1831 = vlaneseq
  %v1832 = vshrl.u32 %v1831, 7
  %v1833 = vsub.s32 0, %v1832
  %v1834 = vrot.slane %v1829, %v1833
  %v1837 = vsel %vm62, %v1827, 0
  %1839 = vmatprep.subr.mxu0 0.0
  %1840 = vmatpush1.msra.mxu0 %v1828
  %1841 = vmatprep.subr.mxu0 0.0
  %1842 = vmatpush1.msra.mxu0 0.0
  %1843 = vmatprep.subr.mxu0 0.0
  %1844 = vmatpush1.msra.mxu0 0.0
  %1845 = vmatprep.subr.mxu0 0.0
  %1846 = vmatpush1.msra.mxu0 0.0
  %1847 = vmatprep.subr.mxu0 0.0
  %1848 = vmatpush1.msra.mxu0 0.0
  %1849 = vmatprep.subr.mxu0 0.0
  %1850 = vmatpush1.msra.mxu0 0.0
  %1851 = vmatprep.subr.mxu0 0.0
  %1852 = vmatpush1.msra.mxu0 0.0
  %1853 = vmatprep.subr.mxu0 0.0
  %1854 = vmatpush1.msra.mxu0 0.0
  %1855 = vmatprep.subr.mxu0 0.0
  %1856 = vmatpush1.msra.mxu0 0.0
  %1857 = vmatprep.subr.mxu0 0.0
  %1858 = vmatpush1.msra.mxu0 0.0
  %1859 = vmatprep.subr.mxu0 0.0
  %1860 = vmatpush1.msra.mxu0 0.0
  %1861 = vmatprep.subr.mxu0 0.0
  %1862 = vmatpush1.msra.mxu0 0.0
  %1863 = vmatprep.subr.mxu0 0.0
  %1864 = vmatpush1.msra.mxu0 0.0
  %1865 = vmatprep.subr.mxu0 0.0
  %1866 = vmatpush1.msra.mxu0 0.0
  %1867 = vmatprep.subr.mxu0 0.0
  %1868 = vmatpush1.msra.mxu0 0.0
  %1869 = vmatprep.subr.mxu0 0.0
  %1870 = vmatpush1.msra.mxu0 0.0
  %1871 = vmatprep.subr.mxu0 0.0
  %1872 = vmatpush1.msra.mxu0 0.0
  %1873 = vmatprep.subr.mxu0 0.0
  %1874 = vmatpush1.msra.mxu0 0.0
  %1875 = vmatprep.subr.mxu0 0.0
  %1876 = vmatpush1.msra.mxu0 0.0
  %1877 = vmatprep.subr.mxu0 0.0
  %1878 = vmatpush1.msra.mxu0 0.0
  %1879 = vmatprep.subr.mxu0 0.0
  %1880 = vmatpush1.msra.mxu0 0.0
  %1881 = vmatprep.subr.mxu0 0.0
  %1882 = vmatpush1.msra.mxu0 0.0
  %1883 = vmatprep.subr.mxu0 0.0
  %1884 = vmatpush1.msra.mxu0 0.0
  %1885 = vmatprep.subr.mxu0 0.0
  %1886 = vmatpush1.msra.mxu0 0.0
  %1887 = vmatprep.subr.mxu0 0.0
  %1888 = vmatpush1.msra.mxu0 0.0
  %1889 = vmatprep.subr.mxu0 0.0
  %1890 = vmatpush1.msra.mxu0 0.0
  %1891 = vmatprep.subr.mxu0 0.0
  %1892 = vmatpush1.msra.mxu0 0.0
  %1893 = vmatprep.subr.mxu0 0.0
  %1894 = vmatpush1.msra.mxu0 0.0
  %1895 = vmatprep.subr.mxu0 0.0
  %1896 = vmatpush1.msra.mxu0 0.0
  %1897 = vmatprep.subr.mxu0 0.0
  %1898 = vmatpush1.msra.mxu0 0.0
  %1899 = vmatprep.subr.mxu0 0.0
  %1900 = vmatpush1.msra.mxu0 0.0
  %1901 = vmatprep.subr.mxu0 0.0
  %1902 = vmatpush1.msra.mxu0 0.0
  %1903 = vmatprep.mubr.f32.mxu0 0.0
  %1904 = vmatmul.mubr.f32.gmra.mrb[0].mxu0 %v1837
  %v1905 = vpop.f32.mrb[0].mxu0
  %v1906 = vadd.f32 %v1834, %v1905
  %v1907 = vpop.f32.mrb[0].mxu0
  %1908 = vdwg.mxu0
  %v1909 = vld [vmem:[%s10] sm:$0xff]
  %v1910 = vld [vmem:[%s10 + $0x8] sm:$0xff]
  %v1911 = vld [vmem:[%s10 + $0x10] sm:$0xff]
  %v1912 = vld [vmem:[%s10 + $0x18] sm:$0xff]
  %v1913 = vld [vmem:[%s10 + $0x20] sm:$0xff]
  %v1914 = vld [vmem:[%s10 + $0x28] sm:$0xff]
  %v1915 = vld [vmem:[%s10 + $0x30] sm:$0xff]
  %v1916 = vld [vmem:[%s10 + $0x38] sm:$0xff]
  %v1917 = vld [vmem:[%s10 + $0x40] sm:$0xff]
  %v1918 = vld [vmem:[%s10 + $0x48] sm:$0xff]
  %v1919 = vld [vmem:[%s10 + $0x50] sm:$0xff]
  %v1920 = vld [vmem:[%s10 + $0x58] sm:$0xff]
  %v1921 = vld [vmem:[%s10 + $0x60] sm:$0xff]
  %v1922 = vld [vmem:[%s10 + $0x68] sm:$0xff]
  %v1923 = vld [vmem:[%s10 + $0x70] sm:$0xff]
  %v1924 = vld [vmem:[%s10 + $0x78] sm:$0xff]
  %v1925 = vld [vmem:[%s10 + $0x80] sm:$0xff]
  %v1926 = vld [vmem:[%s10 + $0x88] sm:$0xff]
  %v1927 = vld [vmem:[%s10 + $0x90] sm:$0xff]
  %v1928 = vld [vmem:[%s10 + $0x98] sm:$0xff]
  %v1929 = vld [vmem:[%s10 + $0xa0] sm:$0xff]
  %v1930 = vld [vmem:[%s10 + $0xa8] sm:$0xff]
  %v1931 = vld [vmem:[%s10 + $0xb0] sm:$0xff]
  %v1932 = vld [vmem:[%s10 + $0xb8] sm:$0xff]
  %v1933 = vld [vmem:[%s11] sm:$0x1]
  %v1935 = vlaneseq
  %v1936 = vshrl.u32 %v1935, 7
  %v1937 = vsub.s32 0, %v1936
  %v1938 = vrot.slane %v1933, %v1937
  %v1941 = vsel %vm1752, %v1906, 0
  %1943 = vmatprep.subr.mxu0 0.0
  %1944 = vmatpush1.msra.mxu0 %v1909
  %1945 = vmatprep.subr.mxu0 0.0
  %1946 = vmatpush1.msra.mxu0 %v1910
  %1947 = vmatprep.subr.mxu0 0.0
  %1948 = vmatpush1.msra.mxu0 %v1911
  %1949 = vmatprep.subr.mxu0 0.0
  %1950 = vmatpush1.msra.mxu0 %v1912
  %1951 = vmatprep.subr.mxu0 0.0
  %1952 = vmatpush1.msra.mxu0 %v1913
  %1953 = vmatprep.subr.mxu0 0.0
  %1954 = vmatpush1.msra.mxu0 %v1914
  %1955 = vmatprep.subr.mxu0 0.0
  %1956 = vmatpush1.msra.mxu0 %v1915
  %1957 = vmatprep.subr.mxu0 0.0
  %1958 = vmatpush1.msra.mxu0 %v1916
  %1959 = vmatprep.subr.mxu0 0.0
  %1960 = vmatpush1.msra.mxu0 %v1917
  %1961 = vmatprep.subr.mxu0 0.0
  %1962 = vmatpush1.msra.mxu0 %v1918
  %1963 = vmatprep.subr.mxu0 0.0
  %1964 = vmatpush1.msra.mxu0 %v1919
  %1965 = vmatprep.subr.mxu0 0.0
  %1966 = vmatpush1.msra.mxu0 %v1920
  %1967 = vmatprep.subr.mxu0 0.0
  %1968 = vmatpush1.msra.mxu0 %v1921
  %1969 = vmatprep.subr.mxu0 0.0
  %1970 = vmatpush1.msra.mxu0 %v1922
  %1971 = vmatprep.subr.mxu0 0.0
  %1972 = vmatpush1.msra.mxu0 %v1923
  %1973 = vmatprep.subr.mxu0 0.0
  %1974 = vmatpush1.msra.mxu0 %v1924
  %1975 = vmatprep.subr.mxu0 0.0
  %1976 = vmatpush1.msra.mxu0 %v1925
  %1977 = vmatprep.subr.mxu0 0.0
  %1978 = vmatpush1.msra.mxu0 %v1926
  %1979 = vmatprep.subr.mxu0 0.0
  %1980 = vmatpush1.msra.mxu0 %v1927
  %1981 = vmatprep.subr.mxu0 0.0
  %1982 = vmatpush1.msra.mxu0 %v1928
  %1983 = vmatprep.subr.mxu0 0.0
  %1984 = vmatpush1.msra.mxu0 %v1929
  %1985 = vmatprep.subr.mxu0 0.0
  %1986 = vmatpush1.msra.mxu0 %v1930
  %1987 = vmatprep.subr.mxu0 0.0
  %1988 = vmatpush1.msra.mxu0 %v1931
  %1989 = vmatprep.subr.mxu0 0.0
  %1990 = vmatpush1.msra.mxu0 %v1932
  %1991 = vmatprep.subr.mxu0 0.0
  %1992 = vmatpush1.msra.mxu0 0.0
  %1993 = vmatprep.subr.mxu0 0.0
  %1994 = vmatpush1.msra.mxu0 0.0
  %1995 = vmatprep.subr.mxu0 0.0
  %1996 = vmatpush1.msra.mxu0 0.0
  %1997 = vmatprep.subr.mxu0 0.0
  %1998 = vmatpush1.msra.mxu0 0.0
  %1999 = vmatprep.subr.mxu0 0.0
  %2000 = vmatpush1.msra.mxu0 0.0
  %2001 = vmatprep.subr.mxu0 0.0
  %2002 = vmatpush1.msra.mxu0 0.0
  %2003 = vmatprep.subr.mxu0 0.0
  %2004 = vmatpush1.msra.mxu0 0.0
  %2005 = vmatprep.subr.mxu0 0.0
  %2006 = vmatpush1.msra.mxu0 0.0
  %2007 = vmatprep.mubr.f32.mxu0 %v1941
  %2008 = vmatmul.mubr.f32.gmra.mrb[0].mxu0 %v1819
  %v2009 = vpop.f32.mrb[0].mxu0
  %v2010 = vadd.f32 %v1938, %v2009
  %v2011 = vpop.f32.mrb[0].mxu0
  %2012 = vdwg.mxu0
  %v2013 = vmin.f32 %v2010, 20.0
  %v2014 = vmul.f32 %v2013, 1.442695
  %v2015 = vpow.pop %v2014
  %v2016 = vadd.f32 %v2015, 2.0
  %v2017 = vmul.f32 %v2015, %v2016
  %v2018 = vadd.f32 %v2017, 2.0
  %v2019 = vrcp.pop %v2018
  %v2020 = vmul.f32 %v2017, %v2019
  %v2021 = vmul.f32 %v2010, %v2020
  %v2022 = vld [vmem:[%s12] sm:$0xff]
  %v2023 = vld [vmem:[%s12 + $0x8] sm:$0xff]
  %v2024 = vld [vmem:[%s12 + $0x10] sm:$0xff]
  %v2025 = vld [vmem:[%s12 + $0x18] sm:$0xff]
  %v2026 = vld [vmem:[%s12 + $0x20] sm:$0xff]
  %v2027 = vld [vmem:[%s12 + $0x28] sm:$0xff]
  %v2028 = vld [vmem:[%s12 + $0x30] sm:$0xff]
  %v2029 = vld [vmem:[%s12 + $0x38] sm:$0xff]
  %v2030 = vld [vmem:[%s13] sm:$0x1]
  %v2032 = vlaneseq
  %v2033 = vshrl.u32 %v2032, 7
  %v2034 = vsub.s32 0, %v2033
  %v2035 = vrot.slane %v2030, %v2034
  %v2038 = vsel %vm1752, %v2021, 0
  %2040 = vmatprep.subr.mxu0 0.0
  %2041 = vmatpush1.msra.mxu0 %v2022
  %2042 = vmatprep.subr.mxu0 0.0
  %2043 = vmatpush1.msra.mxu0 %v2023
  %2044 = vmatprep.subr.mxu0 0.0
  %2045 = vmatpush1.msra.mxu0 %v2024
  %2046 = vmatprep.subr.mxu0 0.0
  %2047 = vmatpush1.msra.mxu0 %v2025
  %2048 = vmatprep.subr.mxu0 0.0
  %2049 = vmatpush1.msra.mxu0 %v2026
  %2050 = vmatprep.subr.mxu0 0.0
  %2051 = vmatpush1.msra.mxu0 %v2027
  %2052 = vmatprep.subr.mxu0 0.0
  %2053 = vmatpush1.msra.mxu0 %v2028
  %2054 = vmatprep.subr.mxu0 0.0
  %2055 = vmatpush1.msra.mxu0 %v2029
  %2056 = vmatprep.subr.mxu0 0.0
  %2057 = vmatpush1.msra.mxu0 0.0
  %2058 = vmatprep.subr.mxu0 0.0
  %2059 = vmatpush1.msra.mxu0 0.0
  %2060 = vmatprep.subr.mxu0 0.0
  %2061 = vmatpush1.msra.mxu0 0.0
  %2062 = vmatprep.subr.mxu0 0.0
  %2063 = vmatpush1.msra.mxu0 0.0
  %2064 = vmatprep.subr.mxu0 0.0
  %2065 = vmatpush1.msra.mxu0 0.0
  %2066 = vmatprep.subr.mxu0 0.0
  %2067 = vmatpush1.msra.mxu0 0.0
  %2068 = vmatprep.subr.mxu0 0.0
  %2069 = vmatpush1.msra.mxu0 0.0
  %2070 = vmatprep.subr.mxu0 0.0
  %2071 = vmatpush1.msra.mxu0 0.0
  %2072 = vmatprep.subr.mxu0 0.0
  %2073 = vmatpush1.msra.mxu0 0.0
  %2074 = vmatprep.subr.mxu0 0.0
  %2075 = vmatpush1.msra.mxu0 0.0
  %2076 = vmatprep.subr.mxu0 0.0
  %2077 = vmatpush1.msra.mxu0 0.0
  %2078 = vmatprep.subr.mxu0 0.0
  %2079 = vmatpush1.msra.mxu0 0.0
  %2080 = vmatprep.subr.mxu0 0.0
  %2081 = vmatpush1.msra.mxu0 0.0
  %2082 = vmatprep.subr.mxu0 0.0
  %2083 = vmatpush1.msra.mxu0 0.0
  %2084 = vmatprep.subr.mxu0 0.0
  %2085 = vmatpush1.msra.mxu0 0.0
  %2086 = vmatprep.subr.mxu0 0.0
  %2087 = vmatpush1.msra.mxu0 0.0
  %2088 = vmatprep.subr.mxu0 0.0
  %2089 = vmatpush1.msra.mxu0 0.0
  %2090 = vmatprep.subr.mxu0 0.0
  %2091 = vmatpush1.msra.mxu0 0.0
  %2092 = vmatprep.subr.mxu0 0.0
  %2093 = vmatpush1.msra.mxu0 0.0
  %2094 = vmatprep.subr.mxu0 0.0
  %2095 = vmatpush1.msra.mxu0 0.0
  %2096 = vmatprep.subr.mxu0 0.0
  %2097 = vmatpush1.msra.mxu0 0.0
  %2098 = vmatprep.subr.mxu0 0.0
  %2099 = vmatpush1.msra.mxu0 0.0
  %2100 = vmatprep.subr.mxu0 0.0
  %2101 = vmatpush1.msra.mxu0 0.0
  %2102 = vmatprep.subr.mxu0 0.0
  %2103 = vmatpush1.msra.mxu0 0.0
  %2104 = vmatprep.mubr.f32.mxu0 0.0
  %2105 = vmatmul.mubr.f32.gmra.mrb[0].mxu0 %v2038
  %v2106 = vpop.f32.mrb[0].mxu0
  %v2107 = vadd.f32 %v2035, %v2106
  %v2108 = vpop.f32.mrb[0].mxu0
  %2109 = vdwg.mxu0
  %v2110 = vmin.f32 %v2107, 20.0
  %v2111 = vmul.f32 %v2110, 1.442695
  %v2112 = vpow.pop %v2111
  %v2113 = vadd.f32 %v2112, 2.0
  %v2114 = vmul.f32 %v2112, %v2113
  %v2115 = vadd.f32 %v2114, 2.0
  %v2116 = vrcp.pop %v2115
  %v2117 = vmul.f32 %v2114, %v2116
  %v2118 = vmul.f32 %v2107, %v2117
  %v2119 = vld [vmem:[%s14] sm:$0xff]
  %v2120 = vld [vmem:[%s14 + $0x8] sm:$0xff]
  %v2121 = vld [vmem:[%s14 + $0x10] sm:$0xff]
  %v2122 = vld [vmem:[%s14 + $0x18] sm:$0xff]
  %v2123 = vld [vmem:[%s14 + $0x20] sm:$0xff]
  %v2124 = vld [vmem:[%s14 + $0x28] sm:$0xff]
  %v2125 = vld [vmem:[%s14 + $0x30] sm:$0xff]
  %v2126 = vld [vmem:[%s14 + $0x38] sm:$0xff]
  %v2127 = vld [vmem:[#allocation2] sm:$0x1]
  %v2129 = vlaneseq
  %v2130 = vshrl.u32 %v2129, 7
  %v2131 = vsub.s32 0, %v2130
  %v2132 = vrot.slane %v2127, %v2131
  %v2135 = vsel %vm1752, %v2118, 0
  %2137 = vmatprep.subr.mxu0 0.0
  %2138 = vmatpush1.msra.mxu0 %v2119
  %2139 = vmatprep.subr.mxu0 0.0
  %2140 = vmatpush1.msra.mxu0 %v2120
  %2141 = vmatprep.subr.mxu0 0.0
  %2142 = vmatpush1.msra.mxu0 %v2121
  %2143 = vmatprep.subr.mxu0 0.0
  %2144 = vmatpush1.msra.mxu0 %v2122
  %2145 = vmatprep.subr.mxu0 0.0
  %2146 = vmatpush1.msra.mxu0 %v2123
  %2147 = vmatprep.subr.mxu0 0.0
  %2148 = vmatpush1.msra.mxu0 %v2124
  %2149 = vmatprep.subr.mxu0 0.0
  %2150 = vmatpush1.msra.mxu0 %v2125
  %2151 = vmatprep.subr.mxu0 0.0
  %2152 = vmatpush1.msra.mxu0 %v2126
  %2153 = vmatprep.subr.mxu0 0.0
  %2154 = vmatpush1.msra.mxu0 0.0
  %2155 = vmatprep.subr.mxu0 0.0
  %2156 = vmatpush1.msra.mxu0 0.0
  %2157 = vmatprep.subr.mxu0 0.0
  %2158 = vmatpush1.msra.mxu0 0.0
  %2159 = vmatprep.subr.mxu0 0.0
  %2160 = vmatpush1.msra.mxu0 0.0
  %2161 = vmatprep.subr.mxu0 0.0
  %2162 = vmatpush1.msra.mxu0 0.0
  %2163 = vmatprep.subr.mxu0 0.0
  %2164 = vmatpush1.msra.mxu0 0.0
  %2165 = vmatprep.subr.mxu0 0.0
  %2166 = vmatpush1.msra.mxu0 0.0
  %2167 = vmatprep.subr.mxu0 0.0
  %2168 = vmatpush1.msra.mxu0 0.0
  %2169 = vmatprep.subr.mxu0 0.0
  %2170 = vmatpush1.msra.mxu0 0.0
  %2171 = vmatprep.subr.mxu0 0.0
  %2172 = vmatpush1.msra.mxu0 0.0
  %2173 = vmatprep.subr.mxu0 0.0
  %2174 = vmatpush1.msra.mxu0 0.0
  %2175 = vmatprep.subr.mxu0 0.0
  %2176 = vmatpush1.msra.mxu0 0.0
  %2177 = vmatprep.subr.mxu0 0.0
  %2178 = vmatpush1.msra.mxu0 0.0
  %2179 = vmatprep.subr.mxu0 0.0
  %2180 = vmatpush1.msra.mxu0 0.0
  %2181 = vmatprep.subr.mxu0 0.0
  %2182 = vmatpush1.msra.mxu0 0.0
  %2183 = vmatprep.subr.mxu0 0.0
  %2184 = vmatpush1.msra.mxu0 0.0
  %2185 = vmatprep.subr.mxu0 0.0
  %2186 = vmatpush1.msra.mxu0 0.0
  %2187 = vmatprep.subr.mxu0 0.0
  %2188 = vmatpush1.msra.mxu0 0.0
  %2189 = vmatprep.subr.mxu0 0.0
  %2190 = vmatpush1.msra.mxu0 0.0
  %2191 = vmatprep.subr.mxu0 0.0
  %2192 = vmatpush1.msra.mxu0 0.0
  %2193 = vmatprep.subr.mxu0 0.0
  %2194 = vmatpush1.msra.mxu0 0.0
  %2195 = vmatprep.subr.mxu0 0.0
  %2196 = vmatpush1.msra.mxu0 0.0
  %2197 = vmatprep.subr.mxu0 0.0
  %2198 = vmatpush1.msra.mxu0 0.0
  %2199 = vmatprep.subr.mxu0 0.0
  %2200 = vmatpush1.msra.mxu0 0.0
  %2201 = vmatprep.mubr.f32.mxu0 0.0
  %2202 = vmatmul.mubr.f32.gmra.mrb[0].mxu0 %v2135
  %v2203 = vpop.f32.mrb[0].mxu0
  %v2204 = vadd.f32 %v2132, %v2203
  %v2205 = vpop.f32.mrb[0].mxu0
  %2206 = vdwg.mxu0
  %vm2207 = vcmask 1024
  %2208 = vst.msk [vmem:[%s16] sm:$0x3] %vm2207, %v2204
  // Predicated region
  $region66: #{tpu_custom_call.1} parent=0 // pred_check
    _
  $region67: #{tpu_custom_call.1} parent=0 // pred_check_branch
    %2210 = sbr.rel (0) target = $region69
  $region68: #{tpu_custom_call.1} parent=0 // pred_region
    _
  $region69: #{tpu_custom_call.1} parent=0 // pred_fallthru
    _
  // Predicated region
  $region70: #{tpu_custom_call.1} parent=0 // pred_check
    _
  $region71: #{tpu_custom_call.1} parent=0 // pred_check_branch
    %2212 = sbr.rel (0) target = $region73
  $region72: #{tpu_custom_call.1} parent=0 // pred_region
    _
  $region73: #{tpu_custom_call.1} parent=0 // pred_fallthru
    _

</llo_original>
